<compile_context>
chip_gen: v7x
topology: tpu7x:2x2x1
jax: 0.10.0
libtpu: 0.0.40
codegen_flags: <defaults>
</compile_context>

<pallas_src>
import math
import functools

import jax
import jax.numpy as jnp
import numpy as np
from jax.experimental import pallas as pl
from jax.experimental.pallas import tpu as pltpu


# ---------------------------------------------------------------------------
# Kernel
# ---------------------------------------------------------------------------
def _layer_norm(x, gamma, beta, eps=1e-6):
    # x: (rows, D); gamma/beta: (1, D). Biased variance, matching torch.nn.LayerNorm.
    mean = jnp.mean(x, axis=-1, keepdims=True)
    xc = x - mean
    var = jnp.mean(xc * xc, axis=-1, keepdims=True)
    inv = jax.lax.rsqrt(var + eps)
    return xc * inv * gamma + beta


def encoder_layer_kernel(
    x_q_ref,          # (1, TQ, D)  query-row tile of x (also the residual)
    x_all_ref,        # (1, S, D)   full sequence (source of K/V)
    gamma_ref, beta_ref,            # (1, D) each (shared LayerNorm)
    wq_ref, bq_ref,                 # (D, H*dk) [compute dtype], (1, H*dk) [f32]
    wkv_ref, bkv_ref,               # (D, H*dk + H*dv), (1, H*dk + H*dv)  (fused K|V)
    wo_ref, bo_ref,                 # (H*dv, D), (1, D)
    w1_ref, b1_ref,                 # (D, F),   (1, F)
    w2_ref, b2_ref,                 # (F, D),   (1, D)
    out_ref,          # (1, TQ, D)
    *, n_heads, d_k, d_v,
):
    f32 = jnp.float32
    cdt = wq_ref.dtype                              # matmul operand dtype (bf16 or f32)
    H = n_heads
    TQ = x_q_ref.shape[1]
    S = x_all_ref.shape[1]

    gamma = gamma_ref[...]
    beta = beta_ref[...]

    x_q = x_q_ref[0]                                # (TQ, D) f32
    x_all = x_all_ref[0]                            # (S, D)  f32

    # ---- sublayer 1: multi-head self-attention (pre-norm) ----
    h_q = _layer_norm(x_q, gamma, beta).astype(cdt)        # (TQ, D)
    h_all = _layer_norm(x_all, gamma, beta).astype(cdt)    # (S, D)

    # Q on the query tile only; fused K|V projection over the full sequence.
    q = jnp.dot(h_q, wq_ref[...], preferred_element_type=f32) + bq_ref[...]     # (TQ, H*dk)
    kv = jnp.dot(h_all, wkv_ref[...], preferred_element_type=f32) + bkv_ref[...]  # (S, H*(dk+dv))
    k = kv[:, : H * d_k]                                                          # (S, H*dk)
    v = kv[:, H * d_k:]                                                           # (S, H*dv)

    # Head-batched attention: (H, rows, head_dim); contraction on the last dim of q/k
    # (no per-head .T materialization, no concatenate).
    q_h = jnp.transpose(q.reshape(TQ, H, d_k), (1, 0, 2)).astype(cdt)   # (H, TQ, dk)
    k_h = jnp.transpose(k.reshape(S, H, d_k), (1, 0, 2)).astype(cdt)    # (H, S,  dk)
    v_h = jnp.transpose(v.reshape(S, H, d_v), (1, 0, 2)).astype(cdt)    # (H, S,  dv)

    scale = 1.0 / math.sqrt(d_k)
    scores = jnp.einsum("hqd,hkd->hqk", q_h, k_h,
                        preferred_element_type=f32) * scale             # (H, TQ, S) f32
    m = jnp.max(scores, axis=-1, keepdims=True)
    p = jnp.exp(scores - m)
    denom = jnp.sum(p, axis=-1, keepdims=True)
    p = p * pl.reciprocal(denom, approx=True)                           # EUP slot

    ctx = jnp.einsum("hqk,hkd->hqd", p.astype(cdt), v_h,
                     preferred_element_type=f32)                        # (H, TQ, dv)
    ctx = jnp.transpose(ctx, (1, 0, 2)).reshape(TQ, H * d_v)            # (TQ, H*dv)

    attn = jnp.dot(ctx.astype(cdt), wo_ref[...],
                   preferred_element_type=f32) + bo_ref[...]            # (TQ, D)
    y1 = x_q + attn                                                     # residual 1

    # ---- sublayer 2: position-wise feed-forward (pre-norm, same LayerNorm) ----
    h2 = _layer_norm(y1, gamma, beta).astype(cdt)
    ff = jnp.dot(h2, w1_ref[...], preferred_element_type=f32) + b1_ref[...]
    ff = jnp.maximum(ff, 0.0).astype(cdt)
    ff = jnp.dot(ff, w2_ref[...], preferred_element_type=f32) + b2_ref[...]

    out_ref[0] = (y1 + ff).astype(out_ref.dtype)                        # residual 2


# ---------------------------------------------------------------------------
# Wrapper
# ---------------------------------------------------------------------------
def _pick_q_tile(S):
    # Full sequence if it's already a modest tile, else the largest 8-aligned
    # tile in a sweep-friendly range that divides S.
    if S <= 512:
        return S
    for t in (512, 256, 128, 64, 32, 16, 8):
        if S % t == 0:
            return t
    return S


def encoder_layer(x, params, *, n_heads, d_k, d_v,
                  compute_dtype=jnp.bfloat16, q_tile=None):
    B, S, D = x.shape
    TQ = _pick_q_tile(S) if q_tile is None else q_tile
    assert S % TQ == 0, "sequence length must be divisible by the query tile"
    num_q = S // TQ

    cdt = compute_dtype
    f32 = jnp.float32

    # Weight packing: fuse K|V projection; store matmul weights in the compute dtype.
    wq = params["wq"].astype(cdt)
    wkv = jnp.concatenate([params["wk"], params["wv"]], axis=1).astype(cdt)
    bkv = jnp.concatenate([params["bk"], params["bv"]], axis=1).astype(f32)
    wo = params["wo"].astype(cdt)
    w1 = params["w1"].astype(cdt)
    w2 = params["w2"].astype(cdt)

    weights = [
        params["gamma"].astype(f32), params["beta"].astype(f32),
        wq, params["bq"].astype(f32),
        wkv, bkv,
        wo, params["bo"].astype(f32),
        w1, params["b1"].astype(f32),
        w2, params["b2"].astype(f32),
    ]

    def rep(a):  # constant-index (resident) full-array spec
        return pl.BlockSpec(a.shape, lambda b, q: (0,) * a.ndim)

    weight_specs = [rep(w) for w in weights]

    kernel = functools.partial(
        encoder_layer_kernel, n_heads=n_heads, d_k=d_k, d_v=d_v
    )

    return pl.pallas_call(
        kernel,
        out_shape=jax.ShapeDtypeStruct((B, S, D), x.dtype),
        grid_spec=pltpu.PrefetchScalarGridSpec(
            num_scalar_prefetch=0,
            grid=(B, num_q),
            in_specs=[
                pl.BlockSpec((1, TQ, D), lambda b, q: (b, q, 0)),   # x (query tile)
                pl.BlockSpec((1, S, D), lambda b, q: (b, 0, 0)),    # x (full seq, K/V)
            ] + weight_specs,
            out_specs=pl.BlockSpec((1, TQ, D), lambda b, q: (b, q, 0)),
        ),
        compiler_params=pltpu.CompilerParams(
            dimension_semantics=("parallel", "parallel"),
        ),
    )(x, x, *weights)


# ---------------------------------------------------------------------------
# Pure-JAX reference (for correctness check)
# ---------------------------------------------------------------------------
def encoder_layer_ref(x, p, *, n_heads, d_k, d_v):
    def ln(z):
        mean = jnp.mean(z, axis=-1, keepdims=True)
        var = jnp.mean((z - mean) ** 2, axis=-1, keepdims=True)
        return (z - mean) / jnp.sqrt(var + 1e-6) * p["gamma"][0] + p["beta"][0]

    B, S, D = x.shape
    h = ln(x)
    q = h @ p["wq"] + p["bq"][0]
    k = h @ p["wk"] + p["bk"][0]
    v = h @ p["wv"] + p["bv"][0]
    q = q.reshape(B, S, n_heads, d_k).transpose(0, 2, 1, 3)
    k = k.reshape(B, S, n_heads, d_k).transpose(0, 2, 1, 3)
    v = v.reshape(B, S, n_heads, d_v).transpose(0, 2, 1, 3)
    scores = jnp.einsum("bhqd,bhkd->bhqk", q, k) / math.sqrt(d_k)
    attn = jax.nn.softmax(scores, axis=-1)
    ctx = jnp.einsum("bhqk,bhkd->bhqd", attn, v).transpose(0, 2, 1, 3).reshape(B, S, -1)
    y1 = x + (ctx @ p["wo"] + p["bo"][0])
    h2 = ln(y1)
    ff = jnp.maximum(h2 @ p["w1"] + p["b1"][0], 0.0) @ p["w2"] + p["b2"][0]
    return y1 + ff


# ---------------------------------------------------------------------------
# Main
# ---------------------------------------------------------------------------
if __name__ == "__main__":
    B, S = 2, 8
    d_model, d_ffn, n_heads, d_k, d_v = 32, 64, 4, 8, 8

    key = jax.random.PRNGKey(0)
    keys = jax.random.split(key, 16)

    def init(k, shape, scale=0.1):
        return (scale * jax.random.normal(k, shape)).astype(jnp.float32)

    params = {
        "gamma": jnp.ones((1, d_model), jnp.float32),
        "beta": jnp.zeros((1, d_model), jnp.float32),
        "wq": init(keys[0], (d_model, n_heads * d_k)),
        "bq": init(keys[1], (1, n_heads * d_k)),
        "wk": init(keys[2], (d_model, n_heads * d_k)),
        "bk": init(keys[3], (1, n_heads * d_k)),
        "wv": init(keys[4], (d_model, n_heads * d_v)),
        "bv": init(keys[5], (1, n_heads * d_v)),
        "wo": init(keys[6], (n_heads * d_v, d_model)),
        "bo": init(keys[7], (1, d_model)),
        "w1": init(keys[8], (d_model, d_ffn)),
        "b1": init(keys[9], (1, d_ffn)),
        "w2": init(keys[10], (d_ffn, d_model)),
        "b2": init(keys[11], (1, d_model)),
    }

    x = init(keys[12], (B, S, d_model), scale=1.0)

    ref = encoder_layer_ref(x, params, n_heads=n_heads, d_k=d_k, d_v=d_v)

    # 1) f32 compute path: tight structural check against the pure-JAX reference
    #    (tolerance leaves headroom for the approx-reciprocal softmax denominator).
    out_f32 = encoder_layer(x, params, n_heads=n_heads, d_k=d_k, d_v=d_v,
                            compute_dtype=jnp.float32)
    out_f32 = jax.block_until_ready(out_f32)
    np.testing.assert_allclose(np.asarray(out_f32), np.asarray(ref),
                               rtol=2e-3, atol=2e-3)

    # 2) bf16-operand compute path (production/perf configuration): looser tolerance.
    out_bf16 = encoder_layer(x, params, n_heads=n_heads, d_k=d_k, d_v=d_v,
                             compute_dtype=jnp.bfloat16)
    out_bf16 = jax.block_until_ready(out_bf16)
    np.testing.assert_allclose(np.asarray(out_bf16), np.asarray(ref),
                               rtol=5e-2, atol=5e-2)

    print("KERNEL_OK")
</pallas_src>

<mosaic_0001>
module attributes {stable_mosaic.version = 11 : i64} {
  func.func @encoder_layer_kernel(%arg0: i32, %arg1: i32, %arg2: memref<1x8x32xf32, #tpu.memory_space<vmem>>, %arg3: memref<1x8x32xf32, #tpu.memory_space<vmem>>, %arg4: memref<1x32xf32, #tpu.memory_space<vmem>>, %arg5: memref<1x32xf32, #tpu.memory_space<vmem>>, %arg6: memref<32x32xf32, #tpu.memory_space<vmem>>, %arg7: memref<1x32xf32, #tpu.memory_space<vmem>>, %arg8: memref<32x64xf32, #tpu.memory_space<vmem>>, %arg9: memref<1x64xf32, #tpu.memory_space<vmem>>, %arg10: memref<32x32xf32, #tpu.memory_space<vmem>>, %arg11: memref<1x32xf32, #tpu.memory_space<vmem>>, %arg12: memref<32x64xf32, #tpu.memory_space<vmem>>, %arg13: memref<1x64xf32, #tpu.memory_space<vmem>>, %arg14: memref<64x32xf32, #tpu.memory_space<vmem>>, %arg15: memref<1x32xf32, #tpu.memory_space<vmem>>, %arg16: memref<1x8x32xf32, #tpu.memory_space<vmem>>) attributes {dimension_semantics = [#tpu.dimension_semantics<parallel>, #tpu.dimension_semantics<parallel>], iteration_bounds = array<i64: 2, 1>, scalar_prefetch = 0 : i64, scratch_operands = 0 : i64, tpu.core_type = #tpu.core_type<tc>, window_params = [{transform_indices = @transform_0, window_bounds = array<i64: 1, 8, 32>}, {transform_indices = @transform_1, window_bounds = array<i64: 1, 8, 32>}, {pipeline_mode = #tpu.pipeline_mode<synchronous>, transform_indices = @transform_2, window_bounds = array<i64: 1, 32>}, {pipeline_mode = #tpu.pipeline_mode<synchronous>, transform_indices = @transform_3, window_bounds = array<i64: 1, 32>}, {pipeline_mode = #tpu.pipeline_mode<synchronous>, transform_indices = @transform_4, window_bounds = array<i64: 32, 32>}, {pipeline_mode = #tpu.pipeline_mode<synchronous>, transform_indices = @transform_5, window_bounds = array<i64: 1, 32>}, {pipeline_mode = #tpu.pipeline_mode<synchronous>, transform_indices = @transform_6, window_bounds = array<i64: 32, 64>}, {pipeline_mode = #tpu.pipeline_mode<synchronous>, transform_indices = @transform_7, window_bounds = array<i64: 1, 64>}, {pipeline_mode = #tpu.pipeline_mode<synchronous>, transform_indices = @transform_8, window_bounds = array<i64: 32, 32>}, {pipeline_mode = #tpu.pipeline_mode<synchronous>, transform_indices = @transform_9, window_bounds = array<i64: 1, 32>}, {pipeline_mode = #tpu.pipeline_mode<synchronous>, transform_indices = @transform_10, window_bounds = array<i64: 32, 64>}, {pipeline_mode = #tpu.pipeline_mode<synchronous>, transform_indices = @transform_11, window_bounds = array<i64: 1, 64>}, {pipeline_mode = #tpu.pipeline_mode<synchronous>, transform_indices = @transform_12, window_bounds = array<i64: 64, 32>}, {pipeline_mode = #tpu.pipeline_mode<synchronous>, transform_indices = @transform_13, window_bounds = array<i64: 1, 32>}, {transform_indices = @transform_14, window_bounds = array<i64: 1, 8, 32>}]} {
    %c0 = arith.constant 0 : index
    %c0_0 = arith.constant 0 : index
    %0 = vector.load %arg4[%c0, %c0_0] : memref<1x32xf32, #tpu.memory_space<vmem>>, vector<1x32xf32>
    %c0_1 = arith.constant 0 : index
    %c0_2 = arith.constant 0 : index
    %1 = vector.load %arg5[%c0_1, %c0_2] : memref<1x32xf32, #tpu.memory_space<vmem>>, vector<1x32xf32>
    %c0_3 = arith.constant 0 : index
    %c0_4 = arith.constant 0 : index
    %c0_5 = arith.constant 0 : index
    %2 = vector.load %arg2[%c0_3, %c0_4, %c0_5] : memref<1x8x32xf32, #tpu.memory_space<vmem>>, vector<1x8x32xf32>
    %3 = vector.shape_cast %2 : vector<1x8x32xf32> to vector<8x32xf32>
    %c0_6 = arith.constant 0 : index
    %c0_7 = arith.constant 0 : index
    %c0_8 = arith.constant 0 : index
    %4 = vector.load %arg3[%c0_6, %c0_7, %c0_8] : memref<1x8x32xf32, #tpu.memory_space<vmem>>, vector<1x8x32xf32>
    %5 = vector.shape_cast %4 : vector<1x8x32xf32> to vector<8x32xf32>
    %cst = arith.constant dense<0.000000e+00> : vector<8xf32>
    %6 = vector.multi_reduction <add>, %3, %cst [1] : vector<8x32xf32> to vector<8xf32>
    %7 = vector.shape_cast %6 : vector<8xf32> to vector<8x1xf32>
    %cst_9 = arith.constant 3.200000e+01 : f32
    %8 = vector.broadcast %cst_9 : f32 to vector<8x1xf32>
    %9 = arith.divf %7, %8 : vector<8x1xf32>
    %10 = vector.broadcast %9 : vector<8x1xf32> to vector<8x32xf32>
    %11 = arith.subf %3, %10 : vector<8x32xf32>
    %12 = arith.mulf %11, %11 : vector<8x32xf32>
    %cst_10 = arith.constant dense<0.000000e+00> : vector<8xf32>
    %13 = vector.multi_reduction <add>, %12, %cst_10 [1] : vector<8x32xf32> to vector<8xf32>
    %14 = vector.shape_cast %13 : vector<8xf32> to vector<8x1xf32>
    %cst_11 = arith.constant 3.200000e+01 : f32
    %15 = vector.broadcast %cst_11 : f32 to vector<8x1xf32>
    %16 = arith.divf %14, %15 : vector<8x1xf32>
    %cst_12 = arith.constant 9.99999997E-7 : f32
    %17 = vector.broadcast %cst_12 : f32 to vector<8x1xf32>
    %18 = arith.addf %16, %17 : vector<8x1xf32>
    %19 = math.rsqrt %18 : vector<8x1xf32>
    %20 = vector.broadcast %19 : vector<8x1xf32> to vector<8x32xf32>
    %21 = arith.mulf %11, %20 : vector<8x32xf32>
    %22 = vector.broadcast %0 : vector<1x32xf32> to vector<8x32xf32>
    %23 = arith.mulf %21, %22 : vector<8x32xf32>
    %24 = vector.broadcast %1 : vector<1x32xf32> to vector<8x32xf32>
    %25 = arith.addf %23, %24 : vector<8x32xf32>
    %cst_13 = arith.constant dense<0.000000e+00> : vector<8xf32>
    %26 = vector.multi_reduction <add>, %5, %cst_13 [1] : vector<8x32xf32> to vector<8xf32>
    %27 = vector.shape_cast %26 : vector<8xf32> to vector<8x1xf32>
    %cst_14 = arith.constant 3.200000e+01 : f32
    %28 = vector.broadcast %cst_14 : f32 to vector<8x1xf32>
    %29 = arith.divf %27, %28 : vector<8x1xf32>
    %30 = vector.broadcast %29 : vector<8x1xf32> to vector<8x32xf32>
    %31 = arith.subf %5, %30 : vector<8x32xf32>
    %32 = arith.mulf %31, %31 : vector<8x32xf32>
    %cst_15 = arith.constant dense<0.000000e+00> : vector<8xf32>
    %33 = vector.multi_reduction <add>, %32, %cst_15 [1] : vector<8x32xf32> to vector<8xf32>
    %34 = vector.shape_cast %33 : vector<8xf32> to vector<8x1xf32>
    %cst_16 = arith.constant 3.200000e+01 : f32
    %35 = vector.broadcast %cst_16 : f32 to vector<8x1xf32>
    %36 = arith.divf %34, %35 : vector<8x1xf32>
    %cst_17 = arith.constant 9.99999997E-7 : f32
    %37 = vector.broadcast %cst_17 : f32 to vector<8x1xf32>
    %38 = arith.addf %36, %37 : vector<8x1xf32>
    %39 = math.rsqrt %38 : vector<8x1xf32>
    %40 = vector.broadcast %39 : vector<8x1xf32> to vector<8x32xf32>
    %41 = arith.mulf %31, %40 : vector<8x32xf32>
    %42 = vector.broadcast %0 : vector<1x32xf32> to vector<8x32xf32>
    %43 = arith.mulf %41, %42 : vector<8x32xf32>
    %44 = vector.broadcast %1 : vector<1x32xf32> to vector<8x32xf32>
    %45 = arith.addf %43, %44 : vector<8x32xf32>
    %c0_18 = arith.constant 0 : index
    %c0_19 = arith.constant 0 : index
    %46 = vector.load %arg6[%c0_18, %c0_19] : memref<32x32xf32, #tpu.memory_space<vmem>>, vector<32x32xf32>
    %cst_20 = arith.constant dense<0.000000e+00> : vector<8x32xf32>
    %47 = tpu.matmul %25, %46, %cst_20 {dimension_numbers = #tpu.dot_dimension_numbers<[1], [0], [0], [1], [0, 0, 1, 1], [], []>} : vector<8x32xf32>, vector<32x32xf32>, vector<8x32xf32> -> vector<8x32xf32>
    %c0_21 = arith.constant 0 : index
    %c0_22 = arith.constant 0 : index
    %48 = vector.load %arg7[%c0_21, %c0_22] : memref<1x32xf32, #tpu.memory_space<vmem>>, vector<1x32xf32>
    %49 = vector.broadcast %48 : vector<1x32xf32> to vector<8x32xf32>
    %50 = arith.addf %47, %49 : vector<8x32xf32>
    %c0_23 = arith.constant 0 : index
    %c0_24 = arith.constant 0 : index
    %51 = vector.load %arg8[%c0_23, %c0_24] : memref<32x64xf32, #tpu.memory_space<vmem>>, vector<32x64xf32>
    %cst_25 = arith.constant dense<0.000000e+00> : vector<8x64xf32>
    %52 = tpu.matmul %45, %51, %cst_25 {dimension_numbers = #tpu.dot_dimension_numbers<[1], [0], [0], [1], [0, 0, 1, 1], [], []>} : vector<8x32xf32>, vector<32x64xf32>, vector<8x64xf32> -> vector<8x64xf32>
    %c0_26 = arith.constant 0 : index
    %c0_27 = arith.constant 0 : index
    %53 = vector.load %arg9[%c0_26, %c0_27] : memref<1x64xf32, #tpu.memory_space<vmem>>, vector<1x64xf32>
    %54 = vector.broadcast %53 : vector<1x64xf32> to vector<8x64xf32>
    %55 = arith.addf %52, %54 : vector<8x64xf32>
    %56 = vector.extract_strided_slice %55 {offsets = [0, 0], sizes = [8, 32], strides = [1, 1]} : vector<8x64xf32> to vector<8x32xf32>
    %57 = vector.extract_strided_slice %55 {offsets = [0, 32], sizes = [8, 32], strides = [1, 1]} : vector<8x64xf32> to vector<8x32xf32>
    %58 = vector.shape_cast %50 : vector<8x32xf32> to vector<8x4x8xf32>
    %59 = tpu.transpose %58, [1, 0, 2] : vector<8x4x8xf32> -> vector<4x8x8xf32>
    %60 = vector.shape_cast %56 : vector<8x32xf32> to vector<8x4x8xf32>
    %61 = tpu.transpose %60, [1, 0, 2] : vector<8x4x8xf32> -> vector<4x8x8xf32>
    %62 = vector.shape_cast %57 : vector<8x32xf32> to vector<8x4x8xf32>
    %63 = tpu.transpose %62, [1, 0, 2] : vector<8x4x8xf32> -> vector<4x8x8xf32>
    "tpu.trace_start"() <{level = 10 : i32, message = "hqd,hkd->hqk"}> : () -> ()
    %cst_28 = arith.constant dense<0.000000e+00> : vector<4x8x8xf32>
    %64 = tpu.matmul %59, %61, %cst_28 {dimension_numbers = #tpu.dot_dimension_numbers<[2], [2], [1], [1], [0, 0, 0, 1, 1, 1], [0], [0]>} : vector<4x8x8xf32>, vector<4x8x8xf32>, vector<4x8x8xf32> -> vector<4x8x8xf32>
    "tpu.trace_stop"() : () -> ()
    %cst_29 = arith.constant 0.353553385 : f32
    %65 = vector.broadcast %cst_29 : f32 to vector<4x8x8xf32>
    %66 = arith.mulf %64, %65 : vector<4x8x8xf32>
    %cst_30 = arith.constant dense<0xFF800000> : vector<4x8xf32>
    %67 = vector.multi_reduction <maximumf>, %66, %cst_30 [2] : vector<4x8x8xf32> to vector<4x8xf32>
    %68 = vector.shape_cast %67 : vector<4x8xf32> to vector<4x8x1xf32>
    %69 = vector.broadcast %68 : vector<4x8x1xf32> to vector<4x8x8xf32>
    %70 = arith.subf %66, %69 : vector<4x8x8xf32>
    %71 = math.exp %70 : vector<4x8x8xf32>
    %cst_31 = arith.constant dense<0.000000e+00> : vector<4x8xf32>
    %72 = vector.multi_reduction <add>, %71, %cst_31 [2] : vector<4x8x8xf32> to vector<4x8xf32>
    %73 = vector.shape_cast %72 : vector<4x8xf32> to vector<4x8x1xf32>
    %74 = tpu.reciprocal %73 {approx = true} : vector<4x8x1xf32> -> vector<4x8x1xf32>
    %75 = vector.broadcast %74 : vector<4x8x1xf32> to vector<4x8x8xf32>
    %76 = arith.mulf %71, %75 : vector<4x8x8xf32>
    "tpu.trace_start"() <{level = 10 : i32, message = "hqk,hkd->hqd"}> : () -> ()
    %cst_32 = arith.constant dense<0.000000e+00> : vector<4x8x8xf32>
    %77 = tpu.matmul %76, %63, %cst_32 {dimension_numbers = #tpu.dot_dimension_numbers<[2], [1], [1], [2], [0, 0, 0, 1, 1, 2], [0], [0]>} : vector<4x8x8xf32>, vector<4x8x8xf32>, vector<4x8x8xf32> -> vector<4x8x8xf32>
    "tpu.trace_stop"() : () -> ()
    %78 = tpu.transpose %77, [1, 0, 2] : vector<4x8x8xf32> -> vector<8x4x8xf32>
    %79 = vector.shape_cast %78 : vector<8x4x8xf32> to vector<8x32xf32>
    %c0_33 = arith.constant 0 : index
    %c0_34 = arith.constant 0 : index
    %80 = vector.load %arg10[%c0_33, %c0_34] : memref<32x32xf32, #tpu.memory_space<vmem>>, vector<32x32xf32>
    %cst_35 = arith.constant dense<0.000000e+00> : vector<8x32xf32>
    %81 = tpu.matmul %79, %80, %cst_35 {dimension_numbers = #tpu.dot_dimension_numbers<[1], [0], [0], [1], [0, 0, 1, 1], [], []>} : vector<8x32xf32>, vector<32x32xf32>, vector<8x32xf32> -> vector<8x32xf32>
    %c0_36 = arith.constant 0 : index
    %c0_37 = arith.constant 0 : index
    %82 = vector.load %arg11[%c0_36, %c0_37] : memref<1x32xf32, #tpu.memory_space<vmem>>, vector<1x32xf32>
    %83 = vector.broadcast %82 : vector<1x32xf32> to vector<8x32xf32>
    %84 = arith.addf %81, %83 : vector<8x32xf32>
    %85 = arith.addf %3, %84 : vector<8x32xf32>
    %cst_38 = arith.constant dense<0.000000e+00> : vector<8xf32>
    %86 = vector.multi_reduction <add>, %85, %cst_38 [1] : vector<8x32xf32> to vector<8xf32>
    %87 = vector.shape_cast %86 : vector<8xf32> to vector<8x1xf32>
    %cst_39 = arith.constant 3.200000e+01 : f32
    %88 = vector.broadcast %cst_39 : f32 to vector<8x1xf32>
    %89 = arith.divf %87, %88 : vector<8x1xf32>
    %90 = vector.broadcast %89 : vector<8x1xf32> to vector<8x32xf32>
    %91 = arith.subf %85, %90 : vector<8x32xf32>
    %92 = arith.mulf %91, %91 : vector<8x32xf32>
    %cst_40 = arith.constant dense<0.000000e+00> : vector<8xf32>
    %93 = vector.multi_reduction <add>, %92, %cst_40 [1] : vector<8x32xf32> to vector<8xf32>
    %94 = vector.shape_cast %93 : vector<8xf32> to vector<8x1xf32>
    %cst_41 = arith.constant 3.200000e+01 : f32
    %95 = vector.broadcast %cst_41 : f32 to vector<8x1xf32>
    %96 = arith.divf %94, %95 : vector<8x1xf32>
    %cst_42 = arith.constant 9.99999997E-7 : f32
    %97 = vector.broadcast %cst_42 : f32 to vector<8x1xf32>
    %98 = arith.addf %96, %97 : vector<8x1xf32>
    %99 = math.rsqrt %98 : vector<8x1xf32>
    %100 = vector.broadcast %99 : vector<8x1xf32> to vector<8x32xf32>
    %101 = arith.mulf %91, %100 : vector<8x32xf32>
    %102 = vector.broadcast %0 : vector<1x32xf32> to vector<8x32xf32>
    %103 = arith.mulf %101, %102 : vector<8x32xf32>
    %104 = vector.broadcast %1 : vector<1x32xf32> to vector<8x32xf32>
    %105 = arith.addf %103, %104 : vector<8x32xf32>
    %c0_43 = arith.constant 0 : index
    %c0_44 = arith.constant 0 : index
    %106 = vector.load %arg12[%c0_43, %c0_44] : memref<32x64xf32, #tpu.memory_space<vmem>>, vector<32x64xf32>
    %cst_45 = arith.constant dense<0.000000e+00> : vector<8x64xf32>
    %107 = tpu.matmul %105, %106, %cst_45 {dimension_numbers = #tpu.dot_dimension_numbers<[1], [0], [0], [1], [0, 0, 1, 1], [], []>} : vector<8x32xf32>, vector<32x64xf32>, vector<8x64xf32> -> vector<8x64xf32>
    %c0_46 = arith.constant 0 : index
    %c0_47 = arith.constant 0 : index
    %108 = vector.load %arg13[%c0_46, %c0_47] : memref<1x64xf32, #tpu.memory_space<vmem>>, vector<1x64xf32>
    %109 = vector.broadcast %108 : vector<1x64xf32> to vector<8x64xf32>
    %110 = arith.addf %107, %109 : vector<8x64xf32>
    %cst_48 = arith.constant 0.000000e+00 : f32
    %111 = vector.broadcast %cst_48 : f32 to vector<8x64xf32>
    %112 = arith.maximumf %110, %111 : vector<8x64xf32>
    %c0_49 = arith.constant 0 : index
    %c0_50 = arith.constant 0 : index
    %113 = vector.load %arg14[%c0_49, %c0_50] : memref<64x32xf32, #tpu.memory_space<vmem>>, vector<64x32xf32>
    %cst_51 = arith.constant dense<0.000000e+00> : vector<8x32xf32>
    %114 = tpu.matmul %112, %113, %cst_51 {dimension_numbers = #tpu.dot_dimension_numbers<[1], [0], [0], [1], [0, 0, 1, 1], [], []>} : vector<8x64xf32>, vector<64x32xf32>, vector<8x32xf32> -> vector<8x32xf32>
    %c0_52 = arith.constant 0 : index
    %c0_53 = arith.constant 0 : index
    %115 = vector.load %arg15[%c0_52, %c0_53] : memref<1x32xf32, #tpu.memory_space<vmem>>, vector<1x32xf32>
    %116 = vector.broadcast %115 : vector<1x32xf32> to vector<8x32xf32>
    %117 = arith.addf %114, %116 : vector<8x32xf32>
    %118 = arith.addf %85, %117 : vector<8x32xf32>
    %c0_54 = arith.constant 0 : index
    %c0_55 = arith.constant 0 : index
    %c0_56 = arith.constant 0 : index
    %119 = vector.load %arg16[%c0_54, %c0_55, %c0_56] : memref<1x8x32xf32, #tpu.memory_space<vmem>>, vector<1x8x32xf32>
    %120 = vector.shape_cast %119 : vector<1x8x32xf32> to vector<8x32xf32>
    %121 = vector.shape_cast %118 : vector<8x32xf32> to vector<1x8x32xf32>
    tpu.vector_store %arg16[%c0_54, %c0_55, %c0_56], %121 {strides = array<i32>} : memref<1x8x32xf32, #tpu.memory_space<vmem>>, vector<1x8x32xf32>,
    return
  }
  func.func @transform_0(%arg0: i32, %arg1: i32) -> (i32, i32, i32) {
    %c0_i32 = arith.constant 0 : i32
    %c0_i32_0 = arith.constant 0 : i32
    return %arg0, %arg1, %c0_i32 : i32, i32, i32
  }
  func.func @transform_1(%arg0: i32, %arg1: i32) -> (i32, i32, i32) {
    %c0_i32 = arith.constant 0 : i32
    %c0_i32_0 = arith.constant 0 : i32
    %c0_i32_1 = arith.constant 0 : i32
    return %arg0, %c0_i32, %c0_i32_0 : i32, i32, i32
  }
  func.func @transform_2(%arg0: i32, %arg1: i32) -> (i32, i32) {
    %c0_i32 = arith.constant 0 : i32
    %c0_i32_0 = arith.constant 0 : i32
    %c0_i32_1 = arith.constant 0 : i32
    return %c0_i32, %c0_i32_0 : i32, i32
  }
  func.func @transform_3(%arg0: i32, %arg1: i32) -> (i32, i32) {
    %c0_i32 = arith.constant 0 : i32
    %c0_i32_0 = arith.constant 0 : i32
    %c0_i32_1 = arith.constant 0 : i32
    return %c0_i32, %c0_i32_0 : i32, i32
  }
  func.func @transform_4(%arg0: i32, %arg1: i32) -> (i32, i32) {
    %c0_i32 = arith.constant 0 : i32
    %c0_i32_0 = arith.constant 0 : i32
    %c0_i32_1 = arith.constant 0 : i32
    return %c0_i32, %c0_i32_0 : i32, i32
  }
  func.func @transform_5(%arg0: i32, %arg1: i32) -> (i32, i32) {
    %c0_i32 = arith.constant 0 : i32
    %c0_i32_0 = arith.constant 0 : i32
    %c0_i32_1 = arith.constant 0 : i32
    return %c0_i32, %c0_i32_0 : i32, i32
  }
  func.func @transform_6(%arg0: i32, %arg1: i32) -> (i32, i32) {
    %c0_i32 = arith.constant 0 : i32
    %c0_i32_0 = arith.constant 0 : i32
    %c0_i32_1 = arith.constant 0 : i32
    return %c0_i32, %c0_i32_0 : i32, i32
  }
  func.func @transform_7(%arg0: i32, %arg1: i32) -> (i32, i32) {
    %c0_i32 = arith.constant 0 : i32
    %c0_i32_0 = arith.constant 0 : i32
    %c0_i32_1 = arith.constant 0 : i32
    return %c0_i32, %c0_i32_0 : i32, i32
  }
  func.func @transform_8(%arg0: i32, %arg1: i32) -> (i32, i32) {
    %c0_i32 = arith.constant 0 : i32
    %c0_i32_0 = arith.constant 0 : i32
    %c0_i32_1 = arith.constant 0 : i32
    return %c0_i32, %c0_i32_0 : i32, i32
  }
  func.func @transform_9(%arg0: i32, %arg1: i32) -> (i32, i32) {
    %c0_i32 = arith.constant 0 : i32
    %c0_i32_0 = arith.constant 0 : i32
    %c0_i32_1 = arith.constant 0 : i32
    return %c0_i32, %c0_i32_0 : i32, i32
  }
  func.func @transform_10(%arg0: i32, %arg1: i32) -> (i32, i32) {
    %c0_i32 = arith.constant 0 : i32
    %c0_i32_0 = arith.constant 0 : i32
    %c0_i32_1 = arith.constant 0 : i32
    return %c0_i32, %c0_i32_0 : i32, i32
  }
  func.func @transform_11(%arg0: i32, %arg1: i32) -> (i32, i32) {
    %c0_i32 = arith.constant 0 : i32
    %c0_i32_0 = arith.constant 0 : i32
    %c0_i32_1 = arith.constant 0 : i32
    return %c0_i32, %c0_i32_0 : i32, i32
  }
  func.func @transform_12(%arg0: i32, %arg1: i32) -> (i32, i32) {
    %c0_i32 = arith.constant 0 : i32
    %c0_i32_0 = arith.constant 0 : i32
    %c0_i32_1 = arith.constant 0 : i32
    return %c0_i32, %c0_i32_0 : i32, i32
  }
  func.func @transform_13(%arg0: i32, %arg1: i32) -> (i32, i32) {
    %c0_i32 = arith.constant 0 : i32
    %c0_i32_0 = arith.constant 0 : i32
    %c0_i32_1 = arith.constant 0 : i32
    return %c0_i32, %c0_i32_0 : i32, i32
  }
  func.func @transform_14(%arg0: i32, %arg1: i32) -> (i32, i32, i32) {
    %c0_i32 = arith.constant 0 : i32
    %c0_i32_0 = arith.constant 0 : i32
    return %arg0, %arg1, %c0_i32 : i32, i32, i32
  }
}

</mosaic_0001>

<llo_original>
// kernel: tpu_custom_call.1
$region0: #{tpu_custom_call.1}
  #allocation0 [shape = 'u32[]', space=smem, size = 0x4, offset = 0x4, fixed_abs, tag = 'smem constant byte address 0x4 - core index']
  #allocation1 [shape = 'u32[144,128]{1,0:T(1,128)}', space=vmem, size = 0x12000, scoped, tag = 'internal scratch']
  %s0 = inlined_call_operand.hbm [shape: f32[2,8,32], index: 0, kind: input, shape index: {}]
  %s1 = inlined_call_operand.hbm [shape: f32[2,8,32], index: 1, kind: input, shape index: {}]
  %s2 = inlined_call_operand.vmem [shape: f32[1,32], index: 2, kind: input, shape index: {}]
  %s3 = inlined_call_operand.vmem [shape: f32[1,32], index: 3, kind: input, shape index: {}]
  %s4 = inlined_call_operand.vmem [shape: f32[32,32], index: 4, kind: input, shape index: {}]
  %s5 = inlined_call_operand.vmem [shape: f32[1,32], index: 5, kind: input, shape index: {}]
  %s6 = inlined_call_operand.vmem [shape: f32[32,64], index: 6, kind: input, shape index: {}]
  %s7 = inlined_call_operand.vmem [shape: f32[1,64], index: 7, kind: input, shape index: {}]
  %s8 = inlined_call_operand.vmem [shape: f32[32,32], index: 8, kind: input, shape index: {}]
  %s9 = inlined_call_operand.vmem [shape: f32[1,32], index: 9, kind: input, shape index: {}]
  %s10 = inlined_call_operand.hbm [shape: f32[32,64], index: 10, kind: input, shape index: {}]
  %s11 = inlined_call_operand.vmem [shape: f32[1,64], index: 11, kind: input, shape index: {}]
  %s12 = inlined_call_operand.vmem [shape: f32[64,32], index: 12, kind: input, shape index: {}]
  %s13 = inlined_call_operand.vmem [shape: f32[1,32], index: 13, kind: input, shape index: {}]
  %s14 = inlined_call_operand.hbm [shape: f32[2,8,32], index: 14, kind: output, shape index: {}]
  %s15 = sld [smem:[#allocation0]]
  $region101: #{tpu_custom_call.1} parent=0
    _
  %s17 = ssub.s32 1, %s15
  %s18 = scalar_select 0, %s17, %s15
  $region1: #{tpu_custom_call.1} parent=0
    #allocation2 [shape = 'u8[8192]{0}', space=vmem, size = 0x2000, scoped, tag = 'input window, operand 0']
    #allocation3 [shape = 's32[2]{0}', space=sflag, size = 0x8, scoped, tag = 'scoped memory for tpu_custom_call.1']
    #allocation4 [shape = 's32[2]{0}', space=sflag, size = 0x8, scoped, tag = 'scoped memory for tpu_custom_call.1']
    #allocation5 [shape = 'u8[8192]{0}', space=vmem, size = 0x2000, scoped, tag = 'input window, operand 1']
    #allocation6 [shape = 's32[2]{0}', space=sflag, size = 0x8, scoped, tag = 'scoped memory for tpu_custom_call.1']
    #allocation7 [shape = 'u8[16384]{0}', space=vmem, size = 0x4000, scoped, tag = 'input window, operand 10, single buffered']
    #allocation8 [shape = 'u8[8192]{0}', space=vmem, size = 0x2000, scoped, tag = 'output window, operand 0']
    %19 = vsyncpa [#allocation3], 0
    %s20 = scalar_lea.sflag [#allocation3], 1
    %21 = vsyncpa %s20, 0
    %22 = vsyncpa [#allocation6], 0
    %s23 = scalar_lea.sflag [#allocation6], 1
    %24 = vsyncpa %s23, 0
    %25 = vsyncpa [#allocation4], 0
    %s26 = scalar_lea.sflag [#allocation4], 1
    %27 = vsyncpa %s26, 0
    loop: start=0, step=1, limit=4
    $region2: #{tpu_custom_call.1} parent=1 // loop_pre_header
      _
    $region3: #{tpu_custom_call.1} parent=1 // loop_header
      %s29 = sphi 0, %s33
      %p30 = scmp.ge.s32.totalorder %s29, 4
      %s36 = sphi 0, %s48
      %s37 = sphi 0, %s44
      %s38 = sphi 0, %s36
      %s39 = sphi 0, %s37
      %s40 = sphi 0, %s38
      %s41 = sphi 0, %s39
      %s53 = sphi 0, %s55
      %s56 = sphi 0, %s53
      %s57 = sphi 0, %s56
      %s73 = sphi 0, %s57
      %s79 = sphi 0, %s81
      %s82 = sphi 0, %s79
      %s83 = sphi 0, %s82
      %s99 = sphi 0, %s83
      %s103 = sphi 0, %s103
      %s105 = sphi 0, %s103
      %s106 = sphi 0, %s105
      %s120 = sphi 0, %s106
      %s124 = sphi 0, %s124
      %s126 = sphi 0, %s124
      %s127 = sphi 0, %s126
      %s141 = sphi 0, %s127
      %s145 = sphi 0, %s145
      %s147 = sphi 0, %s145
      %s148 = sphi 0, %s147
      %s162 = sphi 0, %s148
      %s166 = sphi 0, %s166
      %s168 = sphi 0, %s166
      %s169 = sphi 0, %s168
      %s183 = sphi 0, %s169
      %s187 = sphi 0, %s187
      %s189 = sphi 0, %s187
      %s190 = sphi 0, %s189
      %s204 = sphi 0, %s190
      %s208 = sphi 0, %s208
      %s210 = sphi 0, %s208
      %s211 = sphi 0, %s210
      %s225 = sphi 0, %s211
      %s229 = sphi 0, %s229
      %s231 = sphi 0, %s229
      %s232 = sphi 0, %s231
      %s246 = sphi 0, %s232
      %s250 = sphi 0, %s250
      %s252 = sphi 0, %s250
      %s253 = sphi 0, %s252
      %s267 = sphi 0, %s253
      %s271 = sphi 0, %s271
      %s273 = sphi 0, %s271
      %s274 = sphi 0, %s273
      %s288 = sphi 0, %s274
      %s292 = sphi 0, %s292
      %s294 = sphi 0, %s292
      %s295 = sphi 0, %s294
      %s309 = sphi 0, %s295
      %s313 = sphi 0, %s313
      %s315 = sphi 0, %s313
      %s316 = sphi 0, %s315
      %s330 = sphi 0, %s316
      %s334 = sphi 0, %s334
      %s336 = sphi 0, %s334
      %s337 = sphi 0, %s336
      %s351 = sphi 0, %s337
      %s359 = sphi 0, %s361
      %s362 = sphi 0, %s359
      %s363 = sphi 0, %s362
      %s379 = sphi 0, %s363
    $region4: #{tpu_custom_call.1} parent=1 // loop_header_branch
      %32 = sbr.rel (%p30) target = $region8
    $region5: #{tpu_custom_call.1} parent=1 // loop_body
      %s34 = ssub.s32 %s29, 1
      %s35 = ssub.s32 %s29, 2
      %s42 = sadd.s32 1, %s37
      %p43 = scmp.ge.s32.totalorder %s42, 1
      %s44 = scalar_select %p43, 0, %s42
      %s45 = sadd.s32 1, %s36
      %s46 = scalar_select %p43, %s45, %s36
      %p47 = scmp.ge.s32.totalorder %s46, 2
      %s48 = scalar_select %p47, 0, %s46
      %s49 = ssub.s32 %s36, %s48
      %s50 = ssub.s32 %s37, %s44
      %s51 = sor.u32 %s49, %s50
      %p52 = scmp.eq.s32.totalorder %s51, 0
      %s54 = sadd.s32 %s53, 1
      %s55 = scalar_select %p52, %s53, %s54
      %p58 = pneg %p52
      %p59 = scmp.eq.s32.totalorder %s29, 1
      %p60 = por %p58, %p59
      %p61 = scmp.ne.s32.totalorder %s53, %s56
      %p62 = scmp.eq.s32.totalorder %s29, 0
      %p63 = por %p61, %p62
      %p64 = scmp.ne.s32.totalorder %s53, %s56
      %p65 = scmp.eq.s32.totalorder %s34, 1
      %p66 = por %p64, %p65
      %p67 = scmp.ne.s32.totalorder %s56, %s57
      %p68 = scmp.eq.s32.totalorder %s34, 0
      %p69 = por %p67, %p68
      %p70 = scmp.ne.s32.totalorder %s56, %s57
      %p71 = scmp.eq.s32.totalorder %s35, 1
      %p72 = por %p70, %p71
      %p74 = scmp.ne.s32.totalorder %s57, %s73
      %p75 = scmp.eq.s32.totalorder %s35, 0
      %p76 = por %p74, %p75
      %s77 = ssub.s32 %s36, %s48
      %p78 = scmp.eq.s32.totalorder %s77, 0
      %s80 = sadd.s32 %s79, 1
      %s81 = scalar_select %p78, %s79, %s80
      %p84 = pneg %p78
      %p85 = scmp.eq.s32.totalorder %s29, 1
      %p86 = por %p84, %p85
      %p87 = scmp.ne.s32.totalorder %s79, %s82
      %p88 = scmp.eq.s32.totalorder %s29, 0
      %p89 = por %p87, %p88
      %p90 = scmp.ne.s32.totalorder %s79, %s82
      %p91 = scmp.eq.s32.totalorder %s34, 1
      %p92 = por %p90, %p91
      %p93 = scmp.ne.s32.totalorder %s82, %s83
      %p94 = scmp.eq.s32.totalorder %s34, 0
      %p95 = por %p93, %p94
      %p96 = scmp.ne.s32.totalorder %s82, %s83
      %p97 = scmp.eq.s32.totalorder %s35, 1
      %p98 = por %p96, %p97
      %p100 = scmp.ne.s32.totalorder %s83, %s99
      %p101 = scmp.eq.s32.totalorder %s35, 0
      %p102 = por %p100, %p101
      %s104 = sadd.s32 %s103, 1
      %p107 = scmp.eq.s32.totalorder %s29, 1
      %p108 = scmp.ne.s32.totalorder %s103, %s105
      %p109 = scmp.eq.s32.totalorder %s29, 0
      %p110 = por %p108, %p109
      %p111 = scmp.ne.s32.totalorder %s103, %s105
      %p112 = scmp.eq.s32.totalorder %s34, 1
      %p113 = por %p111, %p112
      %p114 = scmp.ne.s32.totalorder %s105, %s106
      %p115 = scmp.eq.s32.totalorder %s34, 0
      %p116 = por %p114, %p115
      %p117 = scmp.ne.s32.totalorder %s105, %s106
      %p118 = scmp.eq.s32.totalorder %s35, 1
      %p119 = por %p117, %p118
      %p121 = scmp.ne.s32.totalorder %s106, %s120
      %p122 = scmp.eq.s32.totalorder %s35, 0
      %p123 = por %p121, %p122
      %s125 = sadd.s32 %s124, 1
      %p128 = scmp.eq.s32.totalorder %s29, 1
      %p129 = scmp.ne.s32.totalorder %s124, %s126
      %p130 = scmp.eq.s32.totalorder %s29, 0
      %p131 = por %p129, %p130
      %p132 = scmp.ne.s32.totalorder %s124, %s126
      %p133 = scmp.eq.s32.totalorder %s34, 1
      %p134 = por %p132, %p133
      %p135 = scmp.ne.s32.totalorder %s126, %s127
      %p136 = scmp.eq.s32.totalorder %s34, 0
      %p137 = por %p135, %p136
      %p138 = scmp.ne.s32.totalorder %s126, %s127
      %p139 = scmp.eq.s32.totalorder %s35, 1
      %p140 = por %p138, %p139
      %p142 = scmp.ne.s32.totalorder %s127, %s141
      %p143 = scmp.eq.s32.totalorder %s35, 0
      %p144 = por %p142, %p143
      %s146 = sadd.s32 %s145, 1
      %p149 = scmp.eq.s32.totalorder %s29, 1
      %p150 = scmp.ne.s32.totalorder %s145, %s147
      %p151 = scmp.eq.s32.totalorder %s29, 0
      %p152 = por %p150, %p151
      %p153 = scmp.ne.s32.totalorder %s145, %s147
      %p154 = scmp.eq.s32.totalorder %s34, 1
      %p155 = por %p153, %p154
      %p156 = scmp.ne.s32.totalorder %s147, %s148
      %p157 = scmp.eq.s32.totalorder %s34, 0
      %p158 = por %p156, %p157
      %p159 = scmp.ne.s32.totalorder %s147, %s148
      %p160 = scmp.eq.s32.totalorder %s35, 1
      %p161 = por %p159, %p160
      %p163 = scmp.ne.s32.totalorder %s148, %s162
      %p164 = scmp.eq.s32.totalorder %s35, 0
      %p165 = por %p163, %p164
      %s167 = sadd.s32 %s166, 1
      %p170 = scmp.eq.s32.totalorder %s29, 1
      %p171 = scmp.ne.s32.totalorder %s166, %s168
      %p172 = scmp.eq.s32.totalorder %s29, 0
      %p173 = por %p171, %p172
      %p174 = scmp.ne.s32.totalorder %s166, %s168
      %p175 = scmp.eq.s32.totalorder %s34, 1
      %p176 = por %p174, %p175
      %p177 = scmp.ne.s32.totalorder %s168, %s169
      %p178 = scmp.eq.s32.totalorder %s34, 0
      %p179 = por %p177, %p178
      %p180 = scmp.ne.s32.totalorder %s168, %s169
      %p181 = scmp.eq.s32.totalorder %s35, 1
      %p182 = por %p180, %p181
      %p184 = scmp.ne.s32.totalorder %s169, %s183
      %p185 = scmp.eq.s32.totalorder %s35, 0
      %p186 = por %p184, %p185
      %s188 = sadd.s32 %s187, 1
      %p191 = scmp.eq.s32.totalorder %s29, 1
      %p192 = scmp.ne.s32.totalorder %s187, %s189
      %p193 = scmp.eq.s32.totalorder %s29, 0
      %p194 = por %p192, %p193
      %p195 = scmp.ne.s32.totalorder %s187, %s189
      %p196 = scmp.eq.s32.totalorder %s34, 1
      %p197 = por %p195, %p196
      %p198 = scmp.ne.s32.totalorder %s189, %s190
      %p199 = scmp.eq.s32.totalorder %s34, 0
      %p200 = por %p198, %p199
      %p201 = scmp.ne.s32.totalorder %s189, %s190
      %p202 = scmp.eq.s32.totalorder %s35, 1
      %p203 = por %p201, %p202
      %p205 = scmp.ne.s32.totalorder %s190, %s204
      %p206 = scmp.eq.s32.totalorder %s35, 0
      %p207 = por %p205, %p206
      %s209 = sadd.s32 %s208, 1
      %p212 = scmp.eq.s32.totalorder %s29, 1
      %p213 = scmp.ne.s32.totalorder %s208, %s210
      %p214 = scmp.eq.s32.totalorder %s29, 0
      %p215 = por %p213, %p214
      %p216 = scmp.ne.s32.totalorder %s208, %s210
      %p217 = scmp.eq.s32.totalorder %s34, 1
      %p218 = por %p216, %p217
      %p219 = scmp.ne.s32.totalorder %s210, %s211
      %p220 = scmp.eq.s32.totalorder %s34, 0
      %p221 = por %p219, %p220
      %p222 = scmp.ne.s32.totalorder %s210, %s211
      %p223 = scmp.eq.s32.totalorder %s35, 1
      %p224 = por %p222, %p223
      %p226 = scmp.ne.s32.totalorder %s211, %s225
      %p227 = scmp.eq.s32.totalorder %s35, 0
      %p228 = por %p226, %p227
      %s230 = sadd.s32 %s229, 1
      %p233 = scmp.eq.s32.totalorder %s29, 1
      %p234 = scmp.ne.s32.totalorder %s229, %s231
      %p235 = scmp.eq.s32.totalorder %s29, 0
      %p236 = por %p234, %p235
      %p237 = scmp.ne.s32.totalorder %s229, %s231
      %p238 = scmp.eq.s32.totalorder %s34, 1
      %p239 = por %p237, %p238
      %p240 = scmp.ne.s32.totalorder %s231, %s232
      %p241 = scmp.eq.s32.totalorder %s34, 0
      %p242 = por %p240, %p241
      %p243 = scmp.ne.s32.totalorder %s231, %s232
      %p244 = scmp.eq.s32.totalorder %s35, 1
      %p245 = por %p243, %p244
      %p247 = scmp.ne.s32.totalorder %s232, %s246
      %p248 = scmp.eq.s32.totalorder %s35, 0
      %p249 = por %p247, %p248
      %s251 = sadd.s32 %s250, 1
      %p254 = scmp.eq.s32.totalorder %s29, 1
      %p255 = scmp.ne.s32.totalorder %s250, %s252
      %p256 = scmp.eq.s32.totalorder %s29, 0
      %p257 = por %p255, %p256
      %p258 = scmp.ne.s32.totalorder %s250, %s252
      %p259 = scmp.eq.s32.totalorder %s34, 1
      %p260 = por %p258, %p259
      %p261 = scmp.ne.s32.totalorder %s252, %s253
      %p262 = scmp.eq.s32.totalorder %s34, 0
      %p263 = por %p261, %p262
      %p264 = scmp.ne.s32.totalorder %s252, %s253
      %p265 = scmp.eq.s32.totalorder %s35, 1
      %p266 = por %p264, %p265
      %p268 = scmp.ne.s32.totalorder %s253, %s267
      %p269 = scmp.eq.s32.totalorder %s35, 0
      %p270 = por %p268, %p269
      %s272 = sadd.s32 %s271, 1
      %p275 = scmp.eq.s32.totalorder %s29, 1
      %p276 = scmp.ne.s32.totalorder %s271, %s273
      %p277 = scmp.eq.s32.totalorder %s29, 0
      %p278 = por %p276, %p277
      %p279 = scmp.ne.s32.totalorder %s271, %s273
      %p280 = scmp.eq.s32.totalorder %s34, 1
      %p281 = por %p279, %p280
      %p282 = scmp.ne.s32.totalorder %s273, %s274
      %p283 = scmp.eq.s32.totalorder %s34, 0
      %p284 = por %p282, %p283
      %p285 = scmp.ne.s32.totalorder %s273, %s274
      %p286 = scmp.eq.s32.totalorder %s35, 1
      %p287 = por %p285, %p286
      %p289 = scmp.ne.s32.totalorder %s274, %s288
      %p290 = scmp.eq.s32.totalorder %s35, 0
      %p291 = por %p289, %p290
      %s293 = sadd.s32 %s292, 1
      %p296 = scmp.eq.s32.totalorder %s29, 1
      %p297 = scmp.ne.s32.totalorder %s292, %s294
      %p298 = scmp.eq.s32.totalorder %s29, 0
      %p299 = por %p297, %p298
      %p300 = scmp.ne.s32.totalorder %s292, %s294
      %p301 = scmp.eq.s32.totalorder %s34, 1
      %p302 = por %p300, %p301
      %p303 = scmp.ne.s32.totalorder %s294, %s295
      %p304 = scmp.eq.s32.totalorder %s34, 0
      %p305 = por %p303, %p304
      %p306 = scmp.ne.s32.totalorder %s294, %s295
      %p307 = scmp.eq.s32.totalorder %s35, 1
      %p308 = por %p306, %p307
      %p310 = scmp.ne.s32.totalorder %s295, %s309
      %p311 = scmp.eq.s32.totalorder %s35, 0
      %p312 = por %p310, %p311
      %s314 = sadd.s32 %s313, 1
      %p317 = scmp.eq.s32.totalorder %s29, 1
      %p318 = scmp.ne.s32.totalorder %s313, %s315
      %p319 = scmp.eq.s32.totalorder %s29, 0
      %p320 = por %p318, %p319
      %p321 = scmp.ne.s32.totalorder %s313, %s315
      %p322 = scmp.eq.s32.totalorder %s34, 1
      %p323 = por %p321, %p322
      %p324 = scmp.ne.s32.totalorder %s315, %s316
      %p325 = scmp.eq.s32.totalorder %s34, 0
      %p326 = por %p324, %p325
      %p327 = scmp.ne.s32.totalorder %s315, %s316
      %p328 = scmp.eq.s32.totalorder %s35, 1
      %p329 = por %p327, %p328
      %p331 = scmp.ne.s32.totalorder %s316, %s330
      %p332 = scmp.eq.s32.totalorder %s35, 0
      %p333 = por %p331, %p332
      %s335 = sadd.s32 %s334, 1
      %p338 = scmp.eq.s32.totalorder %s29, 1
      %p339 = scmp.ne.s32.totalorder %s334, %s336
      %p340 = scmp.eq.s32.totalorder %s29, 0
      %p341 = por %p339, %p340
      %p342 = scmp.ne.s32.totalorder %s334, %s336
      %p343 = scmp.eq.s32.totalorder %s34, 1
      %p344 = por %p342, %p343
      %p345 = scmp.ne.s32.totalorder %s336, %s337
      %p346 = scmp.eq.s32.totalorder %s34, 0
      %p347 = por %p345, %p346
      %p348 = scmp.ne.s32.totalorder %s336, %s337
      %p349 = scmp.eq.s32.totalorder %s35, 1
      %p350 = por %p348, %p349
      %p352 = scmp.ne.s32.totalorder %s337, %s351
      %p353 = scmp.eq.s32.totalorder %s35, 0
      %p354 = por %p352, %p353
      %s355 = ssub.s32 %s36, %s48
      %s356 = ssub.s32 %s37, %s44
      %s357 = sor.u32 %s355, %s356
      %p358 = scmp.eq.s32.totalorder %s357, 0
      %s360 = sadd.s32 %s359, 1
      %s361 = scalar_select %p358, %s359, %s360
      %p364 = pneg %p358
      %p365 = scmp.eq.s32.totalorder %s29, 1
      %p366 = por %p364, %p365
      %p367 = scmp.ne.s32.totalorder %s359, %s362
      %p368 = scmp.eq.s32.totalorder %s29, 0
      %p369 = por %p367, %p368
      %p370 = scmp.ne.s32.totalorder %s359, %s362
      %p371 = scmp.eq.s32.totalorder %s34, 1
      %p372 = por %p370, %p371
      %p373 = scmp.ne.s32.totalorder %s362, %s363
      %p374 = scmp.eq.s32.totalorder %s34, 0
      %p375 = por %p373, %p374
      %p376 = scmp.ne.s32.totalorder %s362, %s363
      %p377 = scmp.eq.s32.totalorder %s35, 1
      %p378 = por %p376, %p377
      %p380 = scmp.ne.s32.totalorder %s363, %s379
      %p381 = scmp.eq.s32.totalorder %s35, 0
      %p382 = por %p380, %p381
      %p383 = scmp.le.s32.totalorder 1, %s29
      %p384 = scmp.lt.s32.totalorder %s29, 3
      %p385 = pnand %p383, %p384
      %p386 = pneg %p385
      // Predicated region
      $region9: #{tpu_custom_call.1} parent=5 // pred_check
        _
      $region10: #{tpu_custom_call.1} parent=5 // pred_check_branch
        %388 = sbr.rel (%p385) target = $region12
      $region11: #{tpu_custom_call.1} parent=5 // pred_region
        %s389 = ssub.s32 %s29, 1
        // Predicated region
        $region13: #{tpu_custom_call.1} parent=11 // pred_check
          %p390 = pneg %p116
        $region14: #{tpu_custom_call.1} parent=11 // pred_check_branch
          %392 = sbr.rel (%p390) target = $region16
        $region15: #{tpu_custom_call.1} parent=11 // pred_region
          _
        $region16: #{tpu_custom_call.1} parent=11 // pred_fallthru
          _
        // Predicated region
        $region17: #{tpu_custom_call.1} parent=11 // pred_check
          %p393 = pneg %p137
        $region18: #{tpu_custom_call.1} parent=11 // pred_check_branch
          %395 = sbr.rel (%p393) target = $region20
        $region19: #{tpu_custom_call.1} parent=11 // pred_region
          _
        $region20: #{tpu_custom_call.1} parent=11 // pred_fallthru
          _
        // Predicated region
        $region21: #{tpu_custom_call.1} parent=11 // pred_check
          %p396 = pneg %p158
        $region22: #{tpu_custom_call.1} parent=11 // pred_check_branch
          %398 = sbr.rel (%p396) target = $region24
        $region23: #{tpu_custom_call.1} parent=11 // pred_region
          _
        $region24: #{tpu_custom_call.1} parent=11 // pred_fallthru
          _
        // Predicated region
        $region25: #{tpu_custom_call.1} parent=11 // pred_check
          %p399 = pneg %p179
        $region26: #{tpu_custom_call.1} parent=11 // pred_check_branch
          %401 = sbr.rel (%p399) target = $region28
        $region27: #{tpu_custom_call.1} parent=11 // pred_region
          _
        $region28: #{tpu_custom_call.1} parent=11 // pred_fallthru
          _
        // Predicated region
        $region29: #{tpu_custom_call.1} parent=11 // pred_check
          %p402 = pneg %p200
        $region30: #{tpu_custom_call.1} parent=11 // pred_check_branch
          %404 = sbr.rel (%p402) target = $region32
        $region31: #{tpu_custom_call.1} parent=11 // pred_region
          _
        $region32: #{tpu_custom_call.1} parent=11 // pred_fallthru
          _
        // Predicated region
        $region33: #{tpu_custom_call.1} parent=11 // pred_check
          %p405 = pneg %p221
        $region34: #{tpu_custom_call.1} parent=11 // pred_check_branch
          %407 = sbr.rel (%p405) target = $region36
        $region35: #{tpu_custom_call.1} parent=11 // pred_region
          _
        $region36: #{tpu_custom_call.1} parent=11 // pred_fallthru
          _
        // Predicated region
        $region37: #{tpu_custom_call.1} parent=11 // pred_check
          %p408 = pneg %p242
        $region38: #{tpu_custom_call.1} parent=11 // pred_check_branch
          %410 = sbr.rel (%p408) target = $region40
        $region39: #{tpu_custom_call.1} parent=11 // pred_region
          _
        $region40: #{tpu_custom_call.1} parent=11 // pred_fallthru
          _
        // Predicated region
        $region41: #{tpu_custom_call.1} parent=11 // pred_check
          %p411 = pneg %p263
        $region42: #{tpu_custom_call.1} parent=11 // pred_check_branch
          %413 = sbr.rel (%p411) target = $region44
        $region43: #{tpu_custom_call.1} parent=11 // pred_region
          _
        $region44: #{tpu_custom_call.1} parent=11 // pred_fallthru
          _
        // Predicated region
        $region45: #{tpu_custom_call.1} parent=11 // pred_check
          %p414 = pneg %p284
        $region46: #{tpu_custom_call.1} parent=11 // pred_check_branch
          %416 = sbr.rel (%p414) target = $region48
        $region47: #{tpu_custom_call.1} parent=11 // pred_region
          %s418 = ssub.s32 512, 512
          %419 = vsyncadd [#allocation6], %s418
          %s420 = sshll.u32 [#allocation7], 4
          %s421 = int_to_ptr.vmem [resolvable:$true] %s420
          %426 = dma.hbm_to_vmem [thread:$0]  %s10, 512, %s421, [#allocation6], 128, 128, 8
        $region48: #{tpu_custom_call.1} parent=11 // pred_fallthru
          _
        // Predicated region
        $region49: #{tpu_custom_call.1} parent=11 // pred_check
          %p427 = pneg %p305
        $region50: #{tpu_custom_call.1} parent=11 // pred_check_branch
          %429 = sbr.rel (%p427) target = $region52
        $region51: #{tpu_custom_call.1} parent=11 // pred_region
          _
        $region52: #{tpu_custom_call.1} parent=11 // pred_fallthru
          _
        // Predicated region
        $region53: #{tpu_custom_call.1} parent=11 // pred_check
          %p430 = pneg %p326
        $region54: #{tpu_custom_call.1} parent=11 // pred_check_branch
          %432 = sbr.rel (%p430) target = $region56
        $region55: #{tpu_custom_call.1} parent=11 // pred_region
          _
        $region56: #{tpu_custom_call.1} parent=11 // pred_fallthru
          _
        // Predicated region
        $region57: #{tpu_custom_call.1} parent=11 // pred_check
          %p433 = pneg %p347
        $region58: #{tpu_custom_call.1} parent=11 // pred_check_branch
          %435 = sbr.rel (%p433) target = $region60
        $region59: #{tpu_custom_call.1} parent=11 // pred_region
          _
        $region60: #{tpu_custom_call.1} parent=11 // pred_fallthru
          _
      $region12: #{tpu_custom_call.1} parent=5 // pred_fallthru
        _
      %p436 = scmp.lt.s32.totalorder %s29, 2
      // Predicated region
      $region61: #{tpu_custom_call.1} parent=5 // pred_check
        %p437 = pneg %p436
      $region62: #{tpu_custom_call.1} parent=5 // pred_check_branch
        %439 = sbr.rel (%p437) target = $region64
      $region63: #{tpu_custom_call.1} parent=5 // pred_region
        // Predicated region
        $region65: #{tpu_custom_call.1} parent=63 // pred_check
          %p440 = pneg %p63
        $region66: #{tpu_custom_call.1} parent=63 // pred_check_branch
          %442 = sbr.rel (%p440) target = $region68
        $region67: #{tpu_custom_call.1} parent=63 // pred_region
          %s443 = sand.u32 %s53, 1
          %s444 = scalar_lea.sflag [#allocation3], %s443
          %s445 = sand.u32 %s53, 1
          %s446 = smul.addr %s445, 8
          %s447 = scalar_lea.vmem [#allocation2], %s446
          %s449 = ssub.s32 128, 128
          %450 = vsyncadd %s444, %s449
          %s451 = sadd.s32 %s37, %s36
          %s452 = smul.addr %s451, 128
          %s453 = scalar_lea.hbm %s0, %s452
          %s455 = sshll.u32 %s447, 4
          %s456 = int_to_ptr.vmem [resolvable:$true] %s455
          %458 = dma.hbm_to_vmem [thread:$0]  %s453, 128, %s456, %s444
        $region68: #{tpu_custom_call.1} parent=63 // pred_fallthru
          _
        // Predicated region
        $region69: #{tpu_custom_call.1} parent=63 // pred_check
          %p459 = pneg %p89
        $region70: #{tpu_custom_call.1} parent=63 // pred_check_branch
          %461 = sbr.rel (%p459) target = $region72
        $region71: #{tpu_custom_call.1} parent=63 // pred_region
          %s462 = sand.u32 %s29, 1
          %s463 = scalar_lea.sflag [#allocation6], %s462
          %s464 = sand.u32 %s79, 1
          %s465 = smul.addr %s464, 8
          %s466 = scalar_lea.vmem [#allocation5], %s465
          %s468 = ssub.s32 128, 128
          %469 = vsyncadd %s463, %s468
          %s470 = smul.addr %s36, 128
          %s471 = scalar_lea.hbm %s1, %s470
          %s473 = sshll.u32 %s466, 4
          %s474 = int_to_ptr.vmem [resolvable:$true] %s473
          %476 = dma.hbm_to_vmem [thread:$0]  %s471, 128, %s474, %s463
        $region72: #{tpu_custom_call.1} parent=63 // pred_fallthru
          _
      $region64: #{tpu_custom_call.1} parent=5 // pred_fallthru
        _
      %p477 = scmp.le.s32.totalorder 1, %s29
      %p478 = scmp.lt.s32.totalorder %s29, 3
      %p479 = pnand %p477, %p478
      %p480 = pneg %p479
      // Predicated region
      $region73: #{tpu_custom_call.1} parent=5 // pred_check
        _
      $region74: #{tpu_custom_call.1} parent=5 // pred_check_branch
        %482 = sbr.rel (%p479) target = $region76
      $region75: #{tpu_custom_call.1} parent=5 // pred_region
        %s483 = ssub.s32 %s29, 1
        %s484 = sand.u32 %s56, 1
        %s485 = scalar_lea.sflag [#allocation3], %s484
        %s486 = sand.u32 %s56, 1
        %s487 = smul.addr %s486, 8
        %s488 = scalar_lea.vmem [#allocation2], %s487
        // Predicated region
        $region77: #{tpu_custom_call.1} parent=75 // pred_check
          %p489 = pneg %p69
        $region78: #{tpu_custom_call.1} parent=75 // pred_check_branch
          %491 = sbr.rel (%p489) target = $region80
        $region79: #{tpu_custom_call.1} parent=75 // pred_region
          %492 = dma.done %s485, 128
        $region80: #{tpu_custom_call.1} parent=75 // pred_fallthru
          _
        %s493 = sand.u32 %s34, 1
        %s494 = scalar_lea.sflag [#allocation6], %s493
        %s495 = sand.u32 %s82, 1
        %s496 = smul.addr %s495, 8
        %s497 = scalar_lea.vmem [#allocation5], %s496
        // Predicated region
        $region81: #{tpu_custom_call.1} parent=75 // pred_check
          %p498 = pneg %p95
        $region82: #{tpu_custom_call.1} parent=75 // pred_check_branch
          %500 = sbr.rel (%p498) target = $region84
        $region83: #{tpu_custom_call.1} parent=75 // pred_region
          %501 = dma.done %s494, 128
        $region84: #{tpu_custom_call.1} parent=75 // pred_fallthru
          _
        // Predicated region
        $region85: #{tpu_custom_call.1} parent=75 // pred_check
          %p502 = pneg %p284
        $region86: #{tpu_custom_call.1} parent=75 // pred_check_branch
          %504 = sbr.rel (%p502) target = $region88
        $region87: #{tpu_custom_call.1} parent=75 // pred_region
          %505 = dma.done [#allocation6], 512
        $region88: #{tpu_custom_call.1} parent=75 // pred_fallthru
          _
        %s506 = sand.u32 %s56, 1
        %s507 = scalar_lea.sflag [#allocation3], %s506
        %s508 = sand.u32 %s56, 1
        %s509 = smul.addr %s508, 8
        %s510 = scalar_lea.vmem [#allocation2], %s509
        %p511 = pneg %p69
        %p512 = pneg %p66
        %s513 = sand.u32 %s34, 1
        %s514 = scalar_lea.sflag [#allocation6], %s513
        %s515 = sand.u32 %s82, 1
        %s516 = smul.addr %s515, 8
        %s517 = scalar_lea.vmem [#allocation5], %s516
        %p518 = pneg %p95
        %p519 = pneg %p92
        %p520 = pneg %p116
        %p521 = pneg %p113
        %p522 = pneg %p137
        %p523 = pneg %p134
        %p524 = pneg %p158
        %p525 = pneg %p155
        %p526 = pneg %p179
        %p527 = pneg %p176
        %p528 = pneg %p200
        %p529 = pneg %p197
        %p530 = pneg %p221
        %p531 = pneg %p218
        %p532 = pneg %p242
        %p533 = pneg %p239
        %p534 = pneg %p263
        %p535 = pneg %p260
        %p536 = pneg %p284
        %p537 = pneg %p281
        %p538 = pneg %p305
        %p539 = pneg %p302
        %p540 = pneg %p326
        %p541 = pneg %p323
        %p542 = pneg %p347
        %p543 = pneg %p344
        %p544 = pneg %p375
        %p545 = pneg %p372
        %s546 = sand.u32 %s362, 1
        %s547 = scalar_lea.sflag [#allocation4], %s546
        %s548 = sand.u32 %s362, 1
        %s549 = smul.addr %s548, 8
        %s550 = scalar_lea.vmem [#allocation8], %s549
        %v551 = vld [vmem:[%s2] sm:$0x1]
        %v552 = vld [vmem:[%s3] sm:$0x1]
        %v553 = vld [vmem:[%s488] sm:$0xff]
        %v554 = vld [vmem:[%s497] sm:$0xff]
        %vm555 = vcmask 261120
        %v556 = vsel %vm555, %v553, 0.0
        %557 = vadd.xlane.f32.xlu0 %v556
        %v558 = vpop.xlane.xlu0 %557
        %v559 = vrcp.pop 32.0
        %v560 = vmul.f32 %v558, %v559
        %v561 = vsub.f32 %v553, %v560
        %v562 = vmul.f32 %v561, %v561
        %v563 = vsel %vm555, %v562, 0.0
        %564 = vadd.xlane.f32.xlu0 %v563
        %v565 = vpop.xlane.xlu0 %564
        %v566 = vmul.f32 %v565, %v559
        %v567 = vadd.f32 %v566, 1e-06
        %v568 = vrsqrt.pop %v567
        %v569 = vmul.f32 %v561, %v568
        %v571 = vlaneseq
        %v572 = vshrl.u32 %v571, 7
        %v573 = vsub.s32 0, %v572
        %v574 = vrot.slane %v551, %v573
        %v576 = vmul.f32 %v569, %v574
        %v578 = vlaneseq
        %v579 = vshrl.u32 %v578, 7
        %v580 = vsub.s32 0, %v579
        %v581 = vrot.slane %v552, %v580
        %v583 = vadd.f32 %v576, %v581
        %v584 = vsel %vm555, %v554, 0.0
        %585 = vadd.xlane.f32.xlu0 %v584
        %v586 = vpop.xlane.xlu0 %585
        %v587 = vmul.f32 %v586, %v559
        %v588 = vsub.f32 %v554, %v587
        %v589 = vmul.f32 %v588, %v588
        %v590 = vsel %vm555, %v589, 0.0
        %591 = vadd.xlane.f32.xlu0 %v590
        %v592 = vpop.xlane.xlu0 %591
        %v593 = vmul.f32 %v592, %v559
        %v594 = vadd.f32 %v593, 1e-06
        %v595 = vrsqrt.pop %v594
        %v596 = vmul.f32 %v588, %v595
        %v597 = vmul.f32 %v596, %v574
        %v598 = vadd.f32 %v597, %v581
        %v599 = vld [vmem:[%s4] sm:$0xff]
        %v600 = vld [vmem:[%s4 + $0x8] sm:$0xff]
        %v601 = vld [vmem:[%s4 + $0x10] sm:$0xff]
        %v602 = vld [vmem:[%s4 + $0x18] sm:$0xff]
        %v603 = vld [vmem:[%s5] sm:$0x1]
        %v605 = vlaneseq
        %v606 = vshrl.u32 %v605, 7
        %v607 = vsub.s32 0, %v606
        %v608 = vrot.slane %v603, %v607
        %v611 = vsel %vm555, %v583, 0
        %613 = vmatprep.subr.mxu0 0.0
        %614 = vmatpush1.msra.mxu0 %v599
        %615 = vmatprep.subr.mxu0 0.0
        %616 = vmatpush1.msra.mxu0 %v600
        %617 = vmatprep.subr.mxu0 0.0
        %618 = vmatpush1.msra.mxu0 %v601
        %619 = vmatprep.subr.mxu0 0.0
        %620 = vmatpush1.msra.mxu0 %v602
        %621 = vmatprep.subr.mxu0 0.0
        %622 = vmatpush1.msra.mxu0 0.0
        %623 = vmatprep.subr.mxu0 0.0
        %624 = vmatpush1.msra.mxu0 0.0
        %625 = vmatprep.subr.mxu0 0.0
        %626 = vmatpush1.msra.mxu0 0.0
        %627 = vmatprep.subr.mxu0 0.0
        %628 = vmatpush1.msra.mxu0 0.0
        %629 = vmatprep.subr.mxu0 0.0
        %630 = vmatpush1.msra.mxu0 0.0
        %631 = vmatprep.subr.mxu0 0.0
        %632 = vmatpush1.msra.mxu0 0.0
        %633 = vmatprep.subr.mxu0 0.0
        %634 = vmatpush1.msra.mxu0 0.0
        %635 = vmatprep.subr.mxu0 0.0
        %636 = vmatpush1.msra.mxu0 0.0
        %637 = vmatprep.subr.mxu0 0.0
        %638 = vmatpush1.msra.mxu0 0.0
        %639 = vmatprep.subr.mxu0 0.0
        %640 = vmatpush1.msra.mxu0 0.0
        %641 = vmatprep.subr.mxu0 0.0
        %642 = vmatpush1.msra.mxu0 0.0
        %643 = vmatprep.subr.mxu0 0.0
        %644 = vmatpush1.msra.mxu0 0.0
        %645 = vmatprep.subr.mxu0 0.0
        %646 = vmatpush1.msra.mxu0 0.0
        %647 = vmatprep.subr.mxu0 0.0
        %648 = vmatpush1.msra.mxu0 0.0
        %649 = vmatprep.subr.mxu0 0.0
        %650 = vmatpush1.msra.mxu0 0.0
        %651 = vmatprep.subr.mxu0 0.0
        %652 = vmatpush1.msra.mxu0 0.0
        %653 = vmatprep.subr.mxu0 0.0
        %654 = vmatpush1.msra.mxu0 0.0
        %655 = vmatprep.subr.mxu0 0.0
        %656 = vmatpush1.msra.mxu0 0.0
        %657 = vmatprep.subr.mxu0 0.0
        %658 = vmatpush1.msra.mxu0 0.0
        %659 = vmatprep.subr.mxu0 0.0
        %660 = vmatpush1.msra.mxu0 0.0
        %661 = vmatprep.subr.mxu0 0.0
        %662 = vmatpush1.msra.mxu0 0.0
        %663 = vmatprep.subr.mxu0 0.0
        %664 = vmatpush1.msra.mxu0 0.0
        %665 = vmatprep.subr.mxu0 0.0
        %666 = vmatpush1.msra.mxu0 0.0
        %667 = vmatprep.subr.mxu0 0.0
        %668 = vmatpush1.msra.mxu0 0.0
        %669 = vmatprep.subr.mxu0 0.0
        %670 = vmatpush1.msra.mxu0 0.0
        %671 = vmatprep.subr.mxu0 0.0
        %672 = vmatpush1.msra.mxu0 0.0
        %673 = vmatprep.subr.mxu0 0.0
        %674 = vmatpush1.msra.mxu0 0.0
        %675 = vmatprep.subr.mxu0 0.0
        %676 = vmatpush1.msra.mxu0 0.0
        %677 = vmatprep.mubr.f32.mxu0 0.0
        %678 = vmatmul.mubr.f32.gmra.mrb[0].mxu0 %v611
        %v679 = vpop.f32.mrb[0].mxu0
        %v680 = vadd.f32 %v608, %v679
        %v681 = vpop.f32.mrb[0].mxu0
        %682 = vdwg.mxu0
        %v683 = vld [vmem:[%s6] sm:$0xff]
        %v684 = vld [vmem:[%s6 + $0x8] sm:$0xff]
        %v685 = vld [vmem:[%s6 + $0x10] sm:$0xff]
        %v686 = vld [vmem:[%s6 + $0x18] sm:$0xff]
        %v687 = vld [vmem:[%s7] sm:$0x1]
        %v689 = vlaneseq
        %v690 = vshrl.u32 %v689, 7
        %v691 = vsub.s32 0, %v690
        %v692 = vrot.slane %v687, %v691
        %v695 = vsel %vm555, %v598, 0
        %697 = vmatprep.subr.mxu0 0.0
        %698 = vmatpush1.msra.mxu0 %v683
        %699 = vmatprep.subr.mxu0 0.0
        %700 = vmatpush1.msra.mxu0 %v684
        %701 = vmatprep.subr.mxu0 0.0
        %702 = vmatpush1.msra.mxu0 %v685
        %703 = vmatprep.subr.mxu0 0.0
        %704 = vmatpush1.msra.mxu0 %v686
        %705 = vmatprep.subr.mxu0 0.0
        %706 = vmatpush1.msra.mxu0 0.0
        %707 = vmatprep.subr.mxu0 0.0
        %708 = vmatpush1.msra.mxu0 0.0
        %709 = vmatprep.subr.mxu0 0.0
        %710 = vmatpush1.msra.mxu0 0.0
        %711 = vmatprep.subr.mxu0 0.0
        %712 = vmatpush1.msra.mxu0 0.0
        %713 = vmatprep.subr.mxu0 0.0
        %714 = vmatpush1.msra.mxu0 0.0
        %715 = vmatprep.subr.mxu0 0.0
        %716 = vmatpush1.msra.mxu0 0.0
        %717 = vmatprep.subr.mxu0 0.0
        %718 = vmatpush1.msra.mxu0 0.0
        %719 = vmatprep.subr.mxu0 0.0
        %720 = vmatpush1.msra.mxu0 0.0
        %721 = vmatprep.subr.mxu0 0.0
        %722 = vmatpush1.msra.mxu0 0.0
        %723 = vmatprep.subr.mxu0 0.0
        %724 = vmatpush1.msra.mxu0 0.0
        %725 = vmatprep.subr.mxu0 0.0
        %726 = vmatpush1.msra.mxu0 0.0
        %727 = vmatprep.subr.mxu0 0.0
        %728 = vmatpush1.msra.mxu0 0.0
        %729 = vmatprep.subr.mxu0 0.0
        %730 = vmatpush1.msra.mxu0 0.0
        %731 = vmatprep.subr.mxu0 0.0
        %732 = vmatpush1.msra.mxu0 0.0
        %733 = vmatprep.subr.mxu0 0.0
        %734 = vmatpush1.msra.mxu0 0.0
        %735 = vmatprep.subr.mxu0 0.0
        %736 = vmatpush1.msra.mxu0 0.0
        %737 = vmatprep.subr.mxu0 0.0
        %738 = vmatpush1.msra.mxu0 0.0
        %739 = vmatprep.subr.mxu0 0.0
        %740 = vmatpush1.msra.mxu0 0.0
        %741 = vmatprep.subr.mxu0 0.0
        %742 = vmatpush1.msra.mxu0 0.0
        %743 = vmatprep.subr.mxu0 0.0
        %744 = vmatpush1.msra.mxu0 0.0
        %745 = vmatprep.subr.mxu0 0.0
        %746 = vmatpush1.msra.mxu0 0.0
        %747 = vmatprep.subr.mxu0 0.0
        %748 = vmatpush1.msra.mxu0 0.0
        %749 = vmatprep.subr.mxu0 0.0
        %750 = vmatpush1.msra.mxu0 0.0
        %751 = vmatprep.subr.mxu0 0.0
        %752 = vmatpush1.msra.mxu0 0.0
        %753 = vmatprep.subr.mxu0 0.0
        %754 = vmatpush1.msra.mxu0 0.0
        %755 = vmatprep.subr.mxu0 0.0
        %756 = vmatpush1.msra.mxu0 0.0
        %757 = vmatprep.subr.mxu0 0.0
        %758 = vmatpush1.msra.mxu0 0.0
        %759 = vmatprep.subr.mxu0 0.0
        %760 = vmatpush1.msra.mxu0 0.0
        %761 = vmatprep.mubr.f32.mxu0 0.0
        %762 = vmatmul.mubr.f32.gmra.mrb[0].mxu0 %v695
        %v763 = vpop.f32.mrb[0].mxu0
        %v764 = vadd.f32 %v692, %v763
        %v765 = vpop.f32.mrb[0].mxu0
        %766 = vdwg.mxu0
        %768 = vrot.lane.b32.xlu0 %v680, 120
        %v769 = vpop.permute.xlu0 %768
        %771 = vrot.lane.b32.xlu0 %v680, 112
        %v772 = vpop.permute.xlu0 %771
        %774 = vrot.lane.b32.xlu0 %v680, 104
        %v775 = vpop.permute.xlu0 %774
        %v777 = vcombine.low %v680, %v772
        %v778 = vcombine.high %v680, %v772
        %v780 = vunpack.c.l.s4 1983009808
        %v781 = vunpack.c.0.s8 %v780
        %v782 = vlaneseq
        %v783 = vshrl.u32 %v782, 7
        %v784 = vsub.s32 %v781, %v783
        %v785 = vrot.slane %v777, %v784
        %v787 = vunpack.c.l.s4 1983009808
        %v788 = vunpack.c.0.s8 %v787
        %v789 = vlaneseq
        %v790 = vshrl.u32 %v789, 7
        %v791 = vsub.s32 %v788, %v790
        %v792 = vrot.slane %v778, %v791
        %v793 = vcombine.low %v769, %v775
        %v794 = vcombine.high %v769, %v775
        %v796 = vunpack.c.l.s4 1983009808
        %v797 = vunpack.c.0.s8 %v796
        %v798 = vlaneseq
        %v799 = vshrl.u32 %v798, 7
        %v800 = vsub.s32 %v797, %v799
        %v801 = vrot.slane %v793, %v800
        %v803 = vunpack.c.l.s4 1983009808
        %v804 = vunpack.c.0.s8 %v803
        %v805 = vlaneseq
        %v806 = vshrl.u32 %v805, 7
        %v807 = vsub.s32 %v804, %v806
        %v808 = vrot.slane %v794, %v807
        %v809 = vcombine.low %v785, %v801
        %v810 = vcombine.high %v785, %v801
        %v812 = vunpack.c.l.s4 1934713408
        %v813 = vunpack.c.0.s8 %v812
        %v814 = vlaneseq
        %v815 = vshrl.u32 %v814, 7
        %v816 = vsub.s32 %v813, %v815
        %v817 = vrot.slane %v809, %v816
        %v819 = vunpack.c.l.s4 1934713408
        %v820 = vunpack.c.0.s8 %v819
        %v821 = vlaneseq
        %v822 = vshrl.u32 %v821, 7
        %v823 = vsub.s32 %v820, %v822
        %v824 = vrot.slane %v810, %v823
        %v825 = vcombine.low %v792, %v808
        %v826 = vcombine.high %v792, %v808
        %v828 = vunpack.c.l.s4 1934713408
        %v829 = vunpack.c.0.s8 %v828
        %v830 = vlaneseq
        %v831 = vshrl.u32 %v830, 7
        %v832 = vsub.s32 %v829, %v831
        %v833 = vrot.slane %v825, %v832
        %v835 = vunpack.c.l.s4 1934713408
        %v836 = vunpack.c.0.s8 %v835
        %v837 = vlaneseq
        %v838 = vshrl.u32 %v837, 7
        %v839 = vsub.s32 %v836, %v838
        %v840 = vrot.slane %v826, %v839
        %v841 = vcombine.high %v817, 0.0
        %v842 = vcombine.high %v824, 0.0
        %v843 = vcombine.high %v833, 0.0
        %v844 = vcombine.high %v840, 0.0
        %v845 = vcombine.low %v817, %v824
        %v847 = vunpack.c.l.s4 1983009808
        %v848 = vunpack.c.0.s8 %v847
        %v849 = vlaneseq
        %v850 = vshrl.u32 %v849, 7
        %v851 = vsub.s32 %v848, %v850
        %v852 = vrot.slane %v845, %v851
        %v853 = vcombine.low %v841, %v842
        %v855 = vunpack.c.l.s4 1983009808
        %v856 = vunpack.c.0.s8 %v855
        %v857 = vlaneseq
        %v858 = vshrl.u32 %v857, 7
        %v859 = vsub.s32 %v856, %v858
        %v860 = vrot.slane %v853, %v859
        %v861 = vcombine.low %v833, %v840
        %v863 = vunpack.c.l.s4 1983009808
        %v864 = vunpack.c.0.s8 %v863
        %v865 = vlaneseq
        %v866 = vshrl.u32 %v865, 7
        %v867 = vsub.s32 %v864, %v866
        %v868 = vrot.slane %v861, %v867
        %v869 = vcombine.low %v843, %v844
        %v871 = vunpack.c.l.s4 1983009808
        %v872 = vunpack.c.0.s8 %v871
        %v873 = vlaneseq
        %v874 = vshrl.u32 %v873, 7
        %v875 = vsub.s32 %v872, %v874
        %v876 = vrot.slane %v869, %v875
        %v877 = vcombine.low %v852, %v860
        %v878 = vcombine.high %v852, %v860
        %v880 = vunpack.c.l.s4 1934713408
        %v881 = vunpack.c.0.s8 %v880
        %v882 = vlaneseq
        %v883 = vshrl.u32 %v882, 7
        %v884 = vsub.s32 %v881, %v883
        %v885 = vrot.slane %v877, %v884
        %v887 = vunpack.c.l.s4 1934713408
        %v888 = vunpack.c.0.s8 %v887
        %v889 = vlaneseq
        %v890 = vshrl.u32 %v889, 7
        %v891 = vsub.s32 %v888, %v890
        %v892 = vrot.slane %v878, %v891
        %v893 = vcombine.low %v868, %v876
        %v894 = vcombine.high %v868, %v876
        %v896 = vunpack.c.l.s4 1934713408
        %v897 = vunpack.c.0.s8 %v896
        %v898 = vlaneseq
        %v899 = vshrl.u32 %v898, 7
        %v900 = vsub.s32 %v897, %v899
        %v901 = vrot.slane %v893, %v900
        %v903 = vunpack.c.l.s4 1934713408
        %v904 = vunpack.c.0.s8 %v903
        %v905 = vlaneseq
        %v906 = vshrl.u32 %v905, 7
        %v907 = vsub.s32 %v904, %v906
        %v908 = vrot.slane %v894, %v907
        %v909 = vcombine.low %v885, %v901
        %v910 = vcombine.high %v885, %v901
        %v911 = vcombine.low %v892, %v908
        %v912 = vcombine.high %v892, %v908
        %914 = vrot.lane.b32.xlu0 %v764, 120
        %v915 = vpop.permute.xlu0 %914
        %917 = vrot.lane.b32.xlu0 %v764, 112
        %v918 = vpop.permute.xlu0 %917
        %920 = vrot.lane.b32.xlu0 %v764, 104
        %v921 = vpop.permute.xlu0 %920
        %v923 = vcombine.low %v764, %v918
        %v924 = vcombine.high %v764, %v918
        %v926 = vunpack.c.l.s4 1983009808
        %v927 = vunpack.c.0.s8 %v926
        %v928 = vlaneseq
        %v929 = vshrl.u32 %v928, 7
        %v930 = vsub.s32 %v927, %v929
        %v931 = vrot.slane %v923, %v930
        %v933 = vunpack.c.l.s4 1983009808
        %v934 = vunpack.c.0.s8 %v933
        %v935 = vlaneseq
        %v936 = vshrl.u32 %v935, 7
        %v937 = vsub.s32 %v934, %v936
        %v938 = vrot.slane %v924, %v937
        %v939 = vcombine.low %v915, %v921
        %v940 = vcombine.high %v915, %v921
        %v942 = vunpack.c.l.s4 1983009808
        %v943 = vunpack.c.0.s8 %v942
        %v944 = vlaneseq
        %v945 = vshrl.u32 %v944, 7
        %v946 = vsub.s32 %v943, %v945
        %v947 = vrot.slane %v939, %v946
        %v949 = vunpack.c.l.s4 1983009808
        %v950 = vunpack.c.0.s8 %v949
        %v951 = vlaneseq
        %v952 = vshrl.u32 %v951, 7
        %v953 = vsub.s32 %v950, %v952
        %v954 = vrot.slane %v940, %v953
        %v955 = vcombine.low %v931, %v947
        %v956 = vcombine.high %v931, %v947
        %v958 = vunpack.c.l.s4 1934713408
        %v959 = vunpack.c.0.s8 %v958
        %v960 = vlaneseq
        %v961 = vshrl.u32 %v960, 7
        %v962 = vsub.s32 %v959, %v961
        %v963 = vrot.slane %v955, %v962
        %v965 = vunpack.c.l.s4 1934713408
        %v966 = vunpack.c.0.s8 %v965
        %v967 = vlaneseq
        %v968 = vshrl.u32 %v967, 7
        %v969 = vsub.s32 %v966, %v968
        %v970 = vrot.slane %v956, %v969
        %v971 = vcombine.low %v938, %v954
        %v972 = vcombine.high %v938, %v954
        %v974 = vunpack.c.l.s4 1934713408
        %v975 = vunpack.c.0.s8 %v974
        %v976 = vlaneseq
        %v977 = vshrl.u32 %v976, 7
        %v978 = vsub.s32 %v975, %v977
        %v979 = vrot.slane %v971, %v978
        %v981 = vunpack.c.l.s4 1934713408
        %v982 = vunpack.c.0.s8 %v981
        %v983 = vlaneseq
        %v984 = vshrl.u32 %v983, 7
        %v985 = vsub.s32 %v982, %v984
        %v986 = vrot.slane %v972, %v985
        %v987 = vcombine.high %v963, 0.0
        %v988 = vcombine.high %v970, 0.0
        %v989 = vcombine.high %v979, 0.0
        %v990 = vcombine.high %v986, 0.0
        %v991 = vcombine.low %v963, %v970
        %v993 = vunpack.c.l.s4 1983009808
        %v994 = vunpack.c.0.s8 %v993
        %v995 = vlaneseq
        %v996 = vshrl.u32 %v995, 7
        %v997 = vsub.s32 %v994, %v996
        %v998 = vrot.slane %v991, %v997
        %v999 = vcombine.low %v987, %v988
        %v1001 = vunpack.c.l.s4 1983009808
        %v1002 = vunpack.c.0.s8 %v1001
        %v1003 = vlaneseq
        %v1004 = vshrl.u32 %v1003, 7
        %v1005 = vsub.s32 %v1002, %v1004
        %v1006 = vrot.slane %v999, %v1005
        %v1007 = vcombine.low %v979, %v986
        %v1009 = vunpack.c.l.s4 1983009808
        %v1010 = vunpack.c.0.s8 %v1009
        %v1011 = vlaneseq
        %v1012 = vshrl.u32 %v1011, 7
        %v1013 = vsub.s32 %v1010, %v1012
        %v1014 = vrot.slane %v1007, %v1013
        %v1015 = vcombine.low %v989, %v990
        %v1017 = vunpack.c.l.s4 1983009808
        %v1018 = vunpack.c.0.s8 %v1017
        %v1019 = vlaneseq
        %v1020 = vshrl.u32 %v1019, 7
        %v1021 = vsub.s32 %v1018, %v1020
        %v1022 = vrot.slane %v1015, %v1021
        %v1023 = vcombine.low %v998, %v1006
        %v1024 = vcombine.high %v998, %v1006
        %v1026 = vunpack.c.l.s4 1934713408
        %v1027 = vunpack.c.0.s8 %v1026
        %v1028 = vlaneseq
        %v1029 = vshrl.u32 %v1028, 7
        %v1030 = vsub.s32 %v1027, %v1029
        %v1031 = vrot.slane %v1023, %v1030
        %v1033 = vunpack.c.l.s4 1934713408
        %v1034 = vunpack.c.0.s8 %v1033
        %v1035 = vlaneseq
        %v1036 = vshrl.u32 %v1035, 7
        %v1037 = vsub.s32 %v1034, %v1036
        %v1038 = vrot.slane %v1024, %v1037
        %v1039 = vcombine.low %v1014, %v1022
        %v1040 = vcombine.high %v1014, %v1022
        %v1042 = vunpack.c.l.s4 1934713408
        %v1043 = vunpack.c.0.s8 %v1042
        %v1044 = vlaneseq
        %v1045 = vshrl.u32 %v1044, 7
        %v1046 = vsub.s32 %v1043, %v1045
        %v1047 = vrot.slane %v1039, %v1046
        %v1049 = vunpack.c.l.s4 1934713408
        %v1050 = vunpack.c.0.s8 %v1049
        %v1051 = vlaneseq
        %v1052 = vshrl.u32 %v1051, 7
        %v1053 = vsub.s32 %v1050, %v1052
        %v1054 = vrot.slane %v1040, %v1053
        %v1055 = vcombine.low %v1031, %v1047
        %v1056 = vcombine.high %v1031, %v1047
        %v1057 = vcombine.low %v1038, %v1054
        %v1058 = vcombine.high %v1038, %v1054
        %1059 = vrot.lane.b32.xlu0 %v764, 96
        %v1060 = vpop.permute.xlu0 %1059
        %1061 = vrot.lane.b32.xlu0 %v915, 96
        %v1062 = vpop.permute.xlu0 %1061
        %1063 = vrot.lane.b32.xlu0 %v918, 96
        %v1064 = vpop.permute.xlu0 %1063
        %1065 = vrot.lane.b32.xlu0 %v921, 96
        %v1066 = vpop.permute.xlu0 %1065
        %v1071 = vcombine.low %v1060, %v1064
        %v1072 = vcombine.high %v1060, %v1064
        %v1074 = vunpack.c.l.s4 1983009808
        %v1075 = vunpack.c.0.s8 %v1074
        %v1076 = vlaneseq
        %v1077 = vshrl.u32 %v1076, 7
        %v1078 = vsub.s32 %v1075, %v1077
        %v1079 = vrot.slane %v1071, %v1078
        %v1081 = vunpack.c.l.s4 1983009808
        %v1082 = vunpack.c.0.s8 %v1081
        %v1083 = vlaneseq
        %v1084 = vshrl.u32 %v1083, 7
        %v1085 = vsub.s32 %v1082, %v1084
        %v1086 = vrot.slane %v1072, %v1085
        %v1087 = vcombine.low %v1062, %v1066
        %v1088 = vcombine.high %v1062, %v1066
        %v1090 = vunpack.c.l.s4 1983009808
        %v1091 = vunpack.c.0.s8 %v1090
        %v1092 = vlaneseq
        %v1093 = vshrl.u32 %v1092, 7
        %v1094 = vsub.s32 %v1091, %v1093
        %v1095 = vrot.slane %v1087, %v1094
        %v1097 = vunpack.c.l.s4 1983009808
        %v1098 = vunpack.c.0.s8 %v1097
        %v1099 = vlaneseq
        %v1100 = vshrl.u32 %v1099, 7
        %v1101 = vsub.s32 %v1098, %v1100
        %v1102 = vrot.slane %v1088, %v1101
        %v1103 = vcombine.low %v1079, %v1095
        %v1104 = vcombine.high %v1079, %v1095
        %v1106 = vunpack.c.l.s4 1934713408
        %v1107 = vunpack.c.0.s8 %v1106
        %v1108 = vlaneseq
        %v1109 = vshrl.u32 %v1108, 7
        %v1110 = vsub.s32 %v1107, %v1109
        %v1111 = vrot.slane %v1103, %v1110
        %v1113 = vunpack.c.l.s4 1934713408
        %v1114 = vunpack.c.0.s8 %v1113
        %v1115 = vlaneseq
        %v1116 = vshrl.u32 %v1115, 7
        %v1117 = vsub.s32 %v1114, %v1116
        %v1118 = vrot.slane %v1104, %v1117
        %v1119 = vcombine.low %v1086, %v1102
        %v1120 = vcombine.high %v1086, %v1102
        %v1122 = vunpack.c.l.s4 1934713408
        %v1123 = vunpack.c.0.s8 %v1122
        %v1124 = vlaneseq
        %v1125 = vshrl.u32 %v1124, 7
        %v1126 = vsub.s32 %v1123, %v1125
        %v1127 = vrot.slane %v1119, %v1126
        %v1129 = vunpack.c.l.s4 1934713408
        %v1130 = vunpack.c.0.s8 %v1129
        %v1131 = vlaneseq
        %v1132 = vshrl.u32 %v1131, 7
        %v1133 = vsub.s32 %v1130, %v1132
        %v1134 = vrot.slane %v1120, %v1133
        %v1135 = vcombine.high %v1111, 0.0
        %v1136 = vcombine.high %v1118, 0.0
        %v1137 = vcombine.high %v1127, 0.0
        %v1138 = vcombine.high %v1134, 0.0
        %v1139 = vcombine.low %v1111, %v1118
        %v1141 = vunpack.c.l.s4 1983009808
        %v1142 = vunpack.c.0.s8 %v1141
        %v1143 = vlaneseq
        %v1144 = vshrl.u32 %v1143, 7
        %v1145 = vsub.s32 %v1142, %v1144
        %v1146 = vrot.slane %v1139, %v1145
        %v1147 = vcombine.low %v1135, %v1136
        %v1149 = vunpack.c.l.s4 1983009808
        %v1150 = vunpack.c.0.s8 %v1149
        %v1151 = vlaneseq
        %v1152 = vshrl.u32 %v1151, 7
        %v1153 = vsub.s32 %v1150, %v1152
        %v1154 = vrot.slane %v1147, %v1153
        %v1155 = vcombine.low %v1127, %v1134
        %v1157 = vunpack.c.l.s4 1983009808
        %v1158 = vunpack.c.0.s8 %v1157
        %v1159 = vlaneseq
        %v1160 = vshrl.u32 %v1159, 7
        %v1161 = vsub.s32 %v1158, %v1160
        %v1162 = vrot.slane %v1155, %v1161
        %v1163 = vcombine.low %v1137, %v1138
        %v1165 = vunpack.c.l.s4 1983009808
        %v1166 = vunpack.c.0.s8 %v1165
        %v1167 = vlaneseq
        %v1168 = vshrl.u32 %v1167, 7
        %v1169 = vsub.s32 %v1166, %v1168
        %v1170 = vrot.slane %v1163, %v1169
        %v1171 = vcombine.low %v1146, %v1154
        %v1172 = vcombine.high %v1146, %v1154
        %v1174 = vunpack.c.l.s4 1934713408
        %v1175 = vunpack.c.0.s8 %v1174
        %v1176 = vlaneseq
        %v1177 = vshrl.u32 %v1176, 7
        %v1178 = vsub.s32 %v1175, %v1177
        %v1179 = vrot.slane %v1171, %v1178
        %v1181 = vunpack.c.l.s4 1934713408
        %v1182 = vunpack.c.0.s8 %v1181
        %v1183 = vlaneseq
        %v1184 = vshrl.u32 %v1183, 7
        %v1185 = vsub.s32 %v1182, %v1184
        %v1186 = vrot.slane %v1172, %v1185
        %v1187 = vcombine.low %v1162, %v1170
        %v1188 = vcombine.high %v1162, %v1170
        %v1190 = vunpack.c.l.s4 1934713408
        %v1191 = vunpack.c.0.s8 %v1190
        %v1192 = vlaneseq
        %v1193 = vshrl.u32 %v1192, 7
        %v1194 = vsub.s32 %v1191, %v1193
        %v1195 = vrot.slane %v1187, %v1194
        %v1197 = vunpack.c.l.s4 1934713408
        %v1198 = vunpack.c.0.s8 %v1197
        %v1199 = vlaneseq
        %v1200 = vshrl.u32 %v1199, 7
        %v1201 = vsub.s32 %v1198, %v1200
        %v1202 = vrot.slane %v1188, %v1201
        %v1203 = vcombine.low %v1179, %v1195
        %v1204 = vcombine.high %v1179, %v1195
        %v1205 = vcombine.low %v1186, %v1202
        %v1206 = vcombine.high %v1186, %v1202
        %vm1207 = vcmask 64512
        %v1209 = vsel %vm1207, %v909, 0
        %v1212 = vsel %vm1207, %v1055, 0
        %1214 = vmatprep.subr.mxu0 0.0
        %1215 = vmatpush1.xpose.msra.mxu0 %v1212
        %1216 = vmatprep.subr.mxu0 0.0
        %1217 = vmatpush1.xpose.msra.mxu0 0.0
        %1218 = vmatprep.subr.mxu0 0.0
        %1219 = vmatpush1.xpose.msra.mxu0 0.0
        %1220 = vmatprep.subr.mxu0 0.0
        %1221 = vmatpush1.xpose.msra.mxu0 0.0
        %1222 = vmatprep.subr.mxu0 0.0
        %1223 = vmatpush1.xpose.msra.mxu0 0.0
        %1224 = vmatprep.subr.mxu0 0.0
        %1225 = vmatpush1.xpose.msra.mxu0 0.0
        %1226 = vmatprep.subr.mxu0 0.0
        %1227 = vmatpush1.xpose.msra.mxu0 0.0
        %1228 = vmatprep.subr.mxu0 0.0
        %1229 = vmatpush1.xpose.msra.mxu0 0.0
        %1230 = vmatprep.subr.mxu0 0.0
        %1231 = vmatpush1.xpose.msra.mxu0 0.0
        %1232 = vmatprep.subr.mxu0 0.0
        %1233 = vmatpush1.xpose.msra.mxu0 0.0
        %1234 = vmatprep.subr.mxu0 0.0
        %1235 = vmatpush1.xpose.msra.mxu0 0.0
        %1236 = vmatprep.subr.mxu0 0.0
        %1237 = vmatpush1.xpose.msra.mxu0 0.0
        %1238 = vmatprep.subr.mxu0 0.0
        %1239 = vmatpush1.xpose.msra.mxu0 0.0
        %1240 = vmatprep.subr.mxu0 0.0
        %1241 = vmatpush1.xpose.msra.mxu0 0.0
        %1242 = vmatprep.subr.mxu0 0.0
        %1243 = vmatpush1.xpose.msra.mxu0 0.0
        %1244 = vmatprep.subr.mxu0 0.0
        %1245 = vmatpush1.xpose.msra.mxu0 0.0
        %1246 = vmatprep.subr.mxu0 0.0
        %1247 = vmatpush1.xpose.msra.mxu0 0.0
        %1248 = vmatprep.subr.mxu0 0.0
        %1249 = vmatpush1.xpose.msra.mxu0 0.0
        %1250 = vmatprep.subr.mxu0 0.0
        %1251 = vmatpush1.xpose.msra.mxu0 0.0
        %1252 = vmatprep.subr.mxu0 0.0
        %1253 = vmatpush1.xpose.msra.mxu0 0.0
        %1254 = vmatprep.subr.mxu0 0.0
        %1255 = vmatpush1.xpose.msra.mxu0 0.0
        %1256 = vmatprep.subr.mxu0 0.0
        %1257 = vmatpush1.xpose.msra.mxu0 0.0
        %1258 = vmatprep.subr.mxu0 0.0
        %1259 = vmatpush1.xpose.msra.mxu0 0.0
        %1260 = vmatprep.subr.mxu0 0.0
        %1261 = vmatpush1.xpose.msra.mxu0 0.0
        %1262 = vmatprep.subr.mxu0 0.0
        %1263 = vmatpush1.xpose.msra.mxu0 0.0
        %1264 = vmatprep.subr.mxu0 0.0
        %1265 = vmatpush1.xpose.msra.mxu0 0.0
        %1266 = vmatprep.subr.mxu0 0.0
        %1267 = vmatpush1.xpose.msra.mxu0 0.0
        %1268 = vmatprep.subr.mxu0 0.0
        %1269 = vmatpush1.xpose.msra.mxu0 0.0
        %1270 = vmatprep.subr.mxu0 0.0
        %1271 = vmatpush1.xpose.msra.mxu0 0.0
        %1272 = vmatprep.subr.mxu0 0.0
        %1273 = vmatpush1.xpose.msra.mxu0 0.0
        %1274 = vmatprep.subr.mxu0 0.0
        %1275 = vmatpush1.xpose.msra.mxu0 0.0
        %1276 = vmatprep.subr.mxu0 0.0
        %1277 = vmatpush1.xpose.msra.mxu0 0.0
        %1278 = vmatprep.mubr.f32.mxu0 0.0
        %1279 = vmatmul.mubr.f32.gmra.mrb[0].mxu0 %v1209
        %v1280 = vpop.f32.mrb[0].mxu0
        %v1281 = vadd.f32 0.0, %v1280
        %v1282 = vpop.f32.mrb[0].mxu0
        %1283 = vdwg.mxu0
        %v1285 = vsel %vm1207, %v910, 0
        %v1288 = vsel %vm1207, %v1056, 0
        %1290 = vmatprep.subr.mxu0 0.0
        %1291 = vmatpush1.xpose.msra.mxu0 %v1288
        %1292 = vmatprep.subr.mxu0 0.0
        %1293 = vmatpush1.xpose.msra.mxu0 0.0
        %1294 = vmatprep.subr.mxu0 0.0
        %1295 = vmatpush1.xpose.msra.mxu0 0.0
        %1296 = vmatprep.subr.mxu0 0.0
        %1297 = vmatpush1.xpose.msra.mxu0 0.0
        %1298 = vmatprep.subr.mxu0 0.0
        %1299 = vmatpush1.xpose.msra.mxu0 0.0
        %1300 = vmatprep.subr.mxu0 0.0
        %1301 = vmatpush1.xpose.msra.mxu0 0.0
        %1302 = vmatprep.subr.mxu0 0.0
        %1303 = vmatpush1.xpose.msra.mxu0 0.0
        %1304 = vmatprep.subr.mxu0 0.0
        %1305 = vmatpush1.xpose.msra.mxu0 0.0
        %1306 = vmatprep.subr.mxu0 0.0
        %1307 = vmatpush1.xpose.msra.mxu0 0.0
        %1308 = vmatprep.subr.mxu0 0.0
        %1309 = vmatpush1.xpose.msra.mxu0 0.0
        %1310 = vmatprep.subr.mxu0 0.0
        %1311 = vmatpush1.xpose.msra.mxu0 0.0
        %1312 = vmatprep.subr.mxu0 0.0
        %1313 = vmatpush1.xpose.msra.mxu0 0.0
        %1314 = vmatprep.subr.mxu0 0.0
        %1315 = vmatpush1.xpose.msra.mxu0 0.0
        %1316 = vmatprep.subr.mxu0 0.0
        %1317 = vmatpush1.xpose.msra.mxu0 0.0
        %1318 = vmatprep.subr.mxu0 0.0
        %1319 = vmatpush1.xpose.msra.mxu0 0.0
        %1320 = vmatprep.subr.mxu0 0.0
        %1321 = vmatpush1.xpose.msra.mxu0 0.0
        %1322 = vmatprep.subr.mxu0 0.0
        %1323 = vmatpush1.xpose.msra.mxu0 0.0
        %1324 = vmatprep.subr.mxu0 0.0
        %1325 = vmatpush1.xpose.msra.mxu0 0.0
        %1326 = vmatprep.subr.mxu0 0.0
        %1327 = vmatpush1.xpose.msra.mxu0 0.0
        %1328 = vmatprep.subr.mxu0 0.0
        %1329 = vmatpush1.xpose.msra.mxu0 0.0
        %1330 = vmatprep.subr.mxu0 0.0
        %1331 = vmatpush1.xpose.msra.mxu0 0.0
        %1332 = vmatprep.subr.mxu0 0.0
        %1333 = vmatpush1.xpose.msra.mxu0 0.0
        %1334 = vmatprep.subr.mxu0 0.0
        %1335 = vmatpush1.xpose.msra.mxu0 0.0
        %1336 = vmatprep.subr.mxu0 0.0
        %1337 = vmatpush1.xpose.msra.mxu0 0.0
        %1338 = vmatprep.subr.mxu0 0.0
        %1339 = vmatpush1.xpose.msra.mxu0 0.0
        %1340 = vmatprep.subr.mxu0 0.0
        %1341 = vmatpush1.xpose.msra.mxu0 0.0
        %1342 = vmatprep.subr.mxu0 0.0
        %1343 = vmatpush1.xpose.msra.mxu0 0.0
        %1344 = vmatprep.subr.mxu0 0.0
        %1345 = vmatpush1.xpose.msra.mxu0 0.0
        %1346 = vmatprep.subr.mxu0 0.0
        %1347 = vmatpush1.xpose.msra.mxu0 0.0
        %1348 = vmatprep.subr.mxu0 0.0
        %1349 = vmatpush1.xpose.msra.mxu0 0.0
        %1350 = vmatprep.subr.mxu0 0.0
        %1351 = vmatpush1.xpose.msra.mxu0 0.0
        %1352 = vmatprep.subr.mxu0 0.0
        %1353 = vmatpush1.xpose.msra.mxu0 0.0
        %1354 = vmatprep.mubr.f32.mxu0 0.0
        %1355 = vmatmul.mubr.f32.gmra.mrb[0].mxu0 %v1285
        %v1356 = vpop.f32.mrb[0].mxu0
        %v1357 = vadd.f32 0.0, %v1356
        %v1358 = vpop.f32.mrb[0].mxu0
        %1359 = vdwg.mxu0
        %v1361 = vsel %vm1207, %v911, 0
        %v1364 = vsel %vm1207, %v1057, 0
        %1366 = vmatprep.subr.mxu0 0.0
        %1367 = vmatpush1.xpose.msra.mxu0 %v1364
        %1368 = vmatprep.subr.mxu0 0.0
        %1369 = vmatpush1.xpose.msra.mxu0 0.0
        %1370 = vmatprep.subr.mxu0 0.0
        %1371 = vmatpush1.xpose.msra.mxu0 0.0
        %1372 = vmatprep.subr.mxu0 0.0
        %1373 = vmatpush1.xpose.msra.mxu0 0.0
        %1374 = vmatprep.subr.mxu0 0.0
        %1375 = vmatpush1.xpose.msra.mxu0 0.0
        %1376 = vmatprep.subr.mxu0 0.0
        %1377 = vmatpush1.xpose.msra.mxu0 0.0
        %1378 = vmatprep.subr.mxu0 0.0
        %1379 = vmatpush1.xpose.msra.mxu0 0.0
        %1380 = vmatprep.subr.mxu0 0.0
        %1381 = vmatpush1.xpose.msra.mxu0 0.0
        %1382 = vmatprep.subr.mxu0 0.0
        %1383 = vmatpush1.xpose.msra.mxu0 0.0
        %1384 = vmatprep.subr.mxu0 0.0
        %1385 = vmatpush1.xpose.msra.mxu0 0.0
        %1386 = vmatprep.subr.mxu0 0.0
        %1387 = vmatpush1.xpose.msra.mxu0 0.0
        %1388 = vmatprep.subr.mxu0 0.0
        %1389 = vmatpush1.xpose.msra.mxu0 0.0
        %1390 = vmatprep.subr.mxu0 0.0
        %1391 = vmatpush1.xpose.msra.mxu0 0.0
        %1392 = vmatprep.subr.mxu0 0.0
        %1393 = vmatpush1.xpose.msra.mxu0 0.0
        %1394 = vmatprep.subr.mxu0 0.0
        %1395 = vmatpush1.xpose.msra.mxu0 0.0
        %1396 = vmatprep.subr.mxu0 0.0
        %1397 = vmatpush1.xpose.msra.mxu0 0.0
        %1398 = vmatprep.subr.mxu0 0.0
        %1399 = vmatpush1.xpose.msra.mxu0 0.0
        %1400 = vmatprep.subr.mxu0 0.0
        %1401 = vmatpush1.xpose.msra.mxu0 0.0
        %1402 = vmatprep.subr.mxu0 0.0
        %1403 = vmatpush1.xpose.msra.mxu0 0.0
        %1404 = vmatprep.subr.mxu0 0.0
        %1405 = vmatpush1.xpose.msra.mxu0 0.0
        %1406 = vmatprep.subr.mxu0 0.0
        %1407 = vmatpush1.xpose.msra.mxu0 0.0
        %1408 = vmatprep.subr.mxu0 0.0
        %1409 = vmatpush1.xpose.msra.mxu0 0.0
        %1410 = vmatprep.subr.mxu0 0.0
        %1411 = vmatpush1.xpose.msra.mxu0 0.0
        %1412 = vmatprep.subr.mxu0 0.0
        %1413 = vmatpush1.xpose.msra.mxu0 0.0
        %1414 = vmatprep.subr.mxu0 0.0
        %1415 = vmatpush1.xpose.msra.mxu0 0.0
        %1416 = vmatprep.subr.mxu0 0.0
        %1417 = vmatpush1.xpose.msra.mxu0 0.0
        %1418 = vmatprep.subr.mxu0 0.0
        %1419 = vmatpush1.xpose.msra.mxu0 0.0
        %1420 = vmatprep.subr.mxu0 0.0
        %1421 = vmatpush1.xpose.msra.mxu0 0.0
        %1422 = vmatprep.subr.mxu0 0.0
        %1423 = vmatpush1.xpose.msra.mxu0 0.0
        %1424 = vmatprep.subr.mxu0 0.0
        %1425 = vmatpush1.xpose.msra.mxu0 0.0
        %1426 = vmatprep.subr.mxu0 0.0
        %1427 = vmatpush1.xpose.msra.mxu0 0.0
        %1428 = vmatprep.subr.mxu0 0.0
        %1429 = vmatpush1.xpose.msra.mxu0 0.0
        %1430 = vmatprep.mubr.f32.mxu0 0.0
        %1431 = vmatmul.mubr.f32.gmra.mrb[0].mxu0 %v1361
        %v1432 = vpop.f32.mrb[0].mxu0
        %v1433 = vadd.f32 0.0, %v1432
        %v1434 = vpop.f32.mrb[0].mxu0
        %1435 = vdwg.mxu0
        %v1437 = vsel %vm1207, %v912, 0
        %v1440 = vsel %vm1207, %v1058, 0
        %1442 = vmatprep.subr.mxu0 0.0
        %1443 = vmatpush1.xpose.msra.mxu0 %v1440
        %1444 = vmatprep.subr.mxu0 0.0
        %1445 = vmatpush1.xpose.msra.mxu0 0.0
        %1446 = vmatprep.subr.mxu0 0.0
        %1447 = vmatpush1.xpose.msra.mxu0 0.0
        %1448 = vmatprep.subr.mxu0 0.0
        %1449 = vmatpush1.xpose.msra.mxu0 0.0
        %1450 = vmatprep.subr.mxu0 0.0
        %1451 = vmatpush1.xpose.msra.mxu0 0.0
        %1452 = vmatprep.subr.mxu0 0.0
        %1453 = vmatpush1.xpose.msra.mxu0 0.0
        %1454 = vmatprep.subr.mxu0 0.0
        %1455 = vmatpush1.xpose.msra.mxu0 0.0
        %1456 = vmatprep.subr.mxu0 0.0
        %1457 = vmatpush1.xpose.msra.mxu0 0.0
        %1458 = vmatprep.subr.mxu0 0.0
        %1459 = vmatpush1.xpose.msra.mxu0 0.0
        %1460 = vmatprep.subr.mxu0 0.0
        %1461 = vmatpush1.xpose.msra.mxu0 0.0
        %1462 = vmatprep.subr.mxu0 0.0
        %1463 = vmatpush1.xpose.msra.mxu0 0.0
        %1464 = vmatprep.subr.mxu0 0.0
        %1465 = vmatpush1.xpose.msra.mxu0 0.0
        %1466 = vmatprep.subr.mxu0 0.0
        %1467 = vmatpush1.xpose.msra.mxu0 0.0
        %1468 = vmatprep.subr.mxu0 0.0
        %1469 = vmatpush1.xpose.msra.mxu0 0.0
        %1470 = vmatprep.subr.mxu0 0.0
        %1471 = vmatpush1.xpose.msra.mxu0 0.0
        %1472 = vmatprep.subr.mxu0 0.0
        %1473 = vmatpush1.xpose.msra.mxu0 0.0
        %1474 = vmatprep.subr.mxu0 0.0
        %1475 = vmatpush1.xpose.msra.mxu0 0.0
        %1476 = vmatprep.subr.mxu0 0.0
        %1477 = vmatpush1.xpose.msra.mxu0 0.0
        %1478 = vmatprep.subr.mxu0 0.0
        %1479 = vmatpush1.xpose.msra.mxu0 0.0
        %1480 = vmatprep.subr.mxu0 0.0
        %1481 = vmatpush1.xpose.msra.mxu0 0.0
        %1482 = vmatprep.subr.mxu0 0.0
        %1483 = vmatpush1.xpose.msra.mxu0 0.0
        %1484 = vmatprep.subr.mxu0 0.0
        %1485 = vmatpush1.xpose.msra.mxu0 0.0
        %1486 = vmatprep.subr.mxu0 0.0
        %1487 = vmatpush1.xpose.msra.mxu0 0.0
        %1488 = vmatprep.subr.mxu0 0.0
        %1489 = vmatpush1.xpose.msra.mxu0 0.0
        %1490 = vmatprep.subr.mxu0 0.0
        %1491 = vmatpush1.xpose.msra.mxu0 0.0
        %1492 = vmatprep.subr.mxu0 0.0
        %1493 = vmatpush1.xpose.msra.mxu0 0.0
        %1494 = vmatprep.subr.mxu0 0.0
        %1495 = vmatpush1.xpose.msra.mxu0 0.0
        %1496 = vmatprep.subr.mxu0 0.0
        %1497 = vmatpush1.xpose.msra.mxu0 0.0
        %1498 = vmatprep.subr.mxu0 0.0
        %1499 = vmatpush1.xpose.msra.mxu0 0.0
        %1500 = vmatprep.subr.mxu0 0.0
        %1501 = vmatpush1.xpose.msra.mxu0 0.0
        %1502 = vmatprep.subr.mxu0 0.0
        %1503 = vmatpush1.xpose.msra.mxu0 0.0
        %1504 = vmatprep.subr.mxu0 0.0
        %1505 = vmatpush1.xpose.msra.mxu0 0.0
        %1506 = vmatprep.mubr.f32.mxu0 0.0
        %1507 = vmatmul.mubr.f32.gmra.mrb[0].mxu0 %v1437
        %v1508 = vpop.f32.mrb[0].mxu0
        %v1509 = vadd.f32 0.0, %v1508
        %v1510 = vpop.f32.mrb[0].mxu0
        %1511 = vdwg.mxu0
        %v1512 = vmul.f32 %v1281, 0.35355338
        %v1513 = vmul.f32 %v1357, 0.35355338
        %v1514 = vmul.f32 %v1433, 0.35355338
        %v1515 = vmul.f32 %v1509, 0.35355338
        %v1516 = vsel %vm1207, %v1512, -inf
        %1517 = vmax.xlane.f32.xlu0 %v1516
        %v1518 = vpop.xlane.xlu0 %1517
        %v1519 = vsel %vm1207, %v1513, -inf
        %1520 = vmax.xlane.f32.xlu0 %v1519
        %v1521 = vpop.xlane.xlu0 %1520
        %v1522 = vsel %vm1207, %v1514, -inf
        %1523 = vmax.xlane.f32.xlu0 %v1522
        %v1524 = vpop.xlane.xlu0 %1523
        %v1525 = vsel %vm1207, %v1515, -inf
        %1526 = vmax.xlane.f32.xlu0 %v1525
        %v1527 = vpop.xlane.xlu0 %1526
        %v1528 = vsub.f32 %v1512, %v1518
        %v1529 = vsub.f32 %v1513, %v1521
        %v1530 = vsub.f32 %v1514, %v1524
        %v1531 = vsub.f32 %v1515, %v1527
        %v1532 = vmul.f32 %v1528, 1.442695
        %v1533 = vpow.pop %v1532
        %v1534 = vmul.f32 %v1529, 1.442695
        %v1535 = vpow.pop %v1534
        %v1536 = vmul.f32 %v1530, 1.442695
        %v1537 = vpow.pop %v1536
        %v1538 = vmul.f32 %v1531, 1.442695
        %v1539 = vpow.pop %v1538
        %v1540 = vsel %vm1207, %v1533, 0.0
        %1541 = vadd.xlane.f32.xlu0 %v1540
        %v1542 = vpop.xlane.xlu0 %1541
        %v1543 = vsel %vm1207, %v1535, 0.0
        %1544 = vadd.xlane.f32.xlu0 %v1543
        %v1545 = vpop.xlane.xlu0 %1544
        %v1546 = vsel %vm1207, %v1537, 0.0
        %1547 = vadd.xlane.f32.xlu0 %v1546
        %v1548 = vpop.xlane.xlu0 %1547
        %v1549 = vsel %vm1207, %v1539, 0.0
        %1550 = vadd.xlane.f32.xlu0 %v1549
        %v1551 = vpop.xlane.xlu0 %1550
        %v1552 = vrcp.pop %v1542
        %v1553 = vrcp.pop %v1545
        %v1554 = vrcp.pop %v1548
        %v1555 = vrcp.pop %v1551
        %v1556 = vmul.f32 %v1533, %v1552
        %v1557 = vmul.f32 %v1535, %v1553
        %v1558 = vmul.f32 %v1537, %v1554
        %v1559 = vmul.f32 %v1539, %v1555
        %v1561 = vsel %vm1207, %v1556, 0
        %1563 = vmatprep.subr.mxu0 0.0
        %1564 = vmatpush1.msra.mxu0 %v1203
        %1565 = vmatprep.subr.mxu0 0.0
        %1566 = vmatpush1.msra.mxu0 0.0
        %1567 = vmatprep.subr.mxu0 0.0
        %1568 = vmatpush1.msra.mxu0 0.0
        %1569 = vmatprep.subr.mxu0 0.0
        %1570 = vmatpush1.msra.mxu0 0.0
        %1571 = vmatprep.subr.mxu0 0.0
        %1572 = vmatpush1.msra.mxu0 0.0
        %1573 = vmatprep.subr.mxu0 0.0
        %1574 = vmatpush1.msra.mxu0 0.0
        %1575 = vmatprep.subr.mxu0 0.0
        %1576 = vmatpush1.msra.mxu0 0.0
        %1577 = vmatprep.subr.mxu0 0.0
        %1578 = vmatpush1.msra.mxu0 0.0
        %1579 = vmatprep.subr.mxu0 0.0
        %1580 = vmatpush1.msra.mxu0 0.0
        %1581 = vmatprep.subr.mxu0 0.0
        %1582 = vmatpush1.msra.mxu0 0.0
        %1583 = vmatprep.subr.mxu0 0.0
        %1584 = vmatpush1.msra.mxu0 0.0
        %1585 = vmatprep.subr.mxu0 0.0
        %1586 = vmatpush1.msra.mxu0 0.0
        %1587 = vmatprep.subr.mxu0 0.0
        %1588 = vmatpush1.msra.mxu0 0.0
        %1589 = vmatprep.subr.mxu0 0.0
        %1590 = vmatpush1.msra.mxu0 0.0
        %1591 = vmatprep.subr.mxu0 0.0
        %1592 = vmatpush1.msra.mxu0 0.0
        %1593 = vmatprep.subr.mxu0 0.0
        %1594 = vmatpush1.msra.mxu0 0.0
        %1595 = vmatprep.subr.mxu0 0.0
        %1596 = vmatpush1.msra.mxu0 0.0
        %1597 = vmatprep.subr.mxu0 0.0
        %1598 = vmatpush1.msra.mxu0 0.0
        %1599 = vmatprep.subr.mxu0 0.0
        %1600 = vmatpush1.msra.mxu0 0.0
        %1601 = vmatprep.subr.mxu0 0.0
        %1602 = vmatpush1.msra.mxu0 0.0
        %1603 = vmatprep.subr.mxu0 0.0
        %1604 = vmatpush1.msra.mxu0 0.0
        %1605 = vmatprep.subr.mxu0 0.0
        %1606 = vmatpush1.msra.mxu0 0.0
        %1607 = vmatprep.subr.mxu0 0.0
        %1608 = vmatpush1.msra.mxu0 0.0
        %1609 = vmatprep.subr.mxu0 0.0
        %1610 = vmatpush1.msra.mxu0 0.0
        %1611 = vmatprep.subr.mxu0 0.0
        %1612 = vmatpush1.msra.mxu0 0.0
        %1613 = vmatprep.subr.mxu0 0.0
        %1614 = vmatpush1.msra.mxu0 0.0
        %1615 = vmatprep.subr.mxu0 0.0
        %1616 = vmatpush1.msra.mxu0 0.0
        %1617 = vmatprep.subr.mxu0 0.0
        %1618 = vmatpush1.msra.mxu0 0.0
        %1619 = vmatprep.subr.mxu0 0.0
        %1620 = vmatpush1.msra.mxu0 0.0
        %1621 = vmatprep.subr.mxu0 0.0
        %1622 = vmatpush1.msra.mxu0 0.0
        %1623 = vmatprep.subr.mxu0 0.0
        %1624 = vmatpush1.msra.mxu0 0.0
        %1625 = vmatprep.subr.mxu0 0.0
        %1626 = vmatpush1.msra.mxu0 0.0
        %1627 = vmatprep.mubr.f32.mxu0 0.0
        %1628 = vmatmul.mubr.f32.gmra.mrb[0].mxu0 %v1561
        %v1629 = vpop.f32.mrb[0].mxu0
        %v1630 = vadd.f32 0.0, %v1629
        %v1631 = vpop.f32.mrb[0].mxu0
        %1632 = vdwg.mxu0
        %v1634 = vsel %vm1207, %v1557, 0
        %1636 = vmatprep.subr.mxu0 0.0
        %1637 = vmatpush1.msra.mxu0 %v1204
        %1638 = vmatprep.subr.mxu0 0.0
        %1639 = vmatpush1.msra.mxu0 0.0
        %1640 = vmatprep.subr.mxu0 0.0
        %1641 = vmatpush1.msra.mxu0 0.0
        %1642 = vmatprep.subr.mxu0 0.0
        %1643 = vmatpush1.msra.mxu0 0.0
        %1644 = vmatprep.subr.mxu0 0.0
        %1645 = vmatpush1.msra.mxu0 0.0
        %1646 = vmatprep.subr.mxu0 0.0
        %1647 = vmatpush1.msra.mxu0 0.0
        %1648 = vmatprep.subr.mxu0 0.0
        %1649 = vmatpush1.msra.mxu0 0.0
        %1650 = vmatprep.subr.mxu0 0.0
        %1651 = vmatpush1.msra.mxu0 0.0
        %1652 = vmatprep.subr.mxu0 0.0
        %1653 = vmatpush1.msra.mxu0 0.0
        %1654 = vmatprep.subr.mxu0 0.0
        %1655 = vmatpush1.msra.mxu0 0.0
        %1656 = vmatprep.subr.mxu0 0.0
        %1657 = vmatpush1.msra.mxu0 0.0
        %1658 = vmatprep.subr.mxu0 0.0
        %1659 = vmatpush1.msra.mxu0 0.0
        %1660 = vmatprep.subr.mxu0 0.0
        %1661 = vmatpush1.msra.mxu0 0.0
        %1662 = vmatprep.subr.mxu0 0.0
        %1663 = vmatpush1.msra.mxu0 0.0
        %1664 = vmatprep.subr.mxu0 0.0
        %1665 = vmatpush1.msra.mxu0 0.0
        %1666 = vmatprep.subr.mxu0 0.0
        %1667 = vmatpush1.msra.mxu0 0.0
        %1668 = vmatprep.subr.mxu0 0.0
        %1669 = vmatpush1.msra.mxu0 0.0
        %1670 = vmatprep.subr.mxu0 0.0
        %1671 = vmatpush1.msra.mxu0 0.0
        %1672 = vmatprep.subr.mxu0 0.0
        %1673 = vmatpush1.msra.mxu0 0.0
        %1674 = vmatprep.subr.mxu0 0.0
        %1675 = vmatpush1.msra.mxu0 0.0
        %1676 = vmatprep.subr.mxu0 0.0
        %1677 = vmatpush1.msra.mxu0 0.0
        %1678 = vmatprep.subr.mxu0 0.0
        %1679 = vmatpush1.msra.mxu0 0.0
        %1680 = vmatprep.subr.mxu0 0.0
        %1681 = vmatpush1.msra.mxu0 0.0
        %1682 = vmatprep.subr.mxu0 0.0
        %1683 = vmatpush1.msra.mxu0 0.0
        %1684 = vmatprep.subr.mxu0 0.0
        %1685 = vmatpush1.msra.mxu0 0.0
        %1686 = vmatprep.subr.mxu0 0.0
        %1687 = vmatpush1.msra.mxu0 0.0
        %1688 = vmatprep.subr.mxu0 0.0
        %1689 = vmatpush1.msra.mxu0 0.0
        %1690 = vmatprep.subr.mxu0 0.0
        %1691 = vmatpush1.msra.mxu0 0.0
        %1692 = vmatprep.subr.mxu0 0.0
        %1693 = vmatpush1.msra.mxu0 0.0
        %1694 = vmatprep.subr.mxu0 0.0
        %1695 = vmatpush1.msra.mxu0 0.0
        %1696 = vmatprep.subr.mxu0 0.0
        %1697 = vmatpush1.msra.mxu0 0.0
        %1698 = vmatprep.subr.mxu0 0.0
        %1699 = vmatpush1.msra.mxu0 0.0
        %1700 = vmatprep.mubr.f32.mxu0 0.0
        %1701 = vmatmul.mubr.f32.gmra.mrb[0].mxu0 %v1634
        %v1702 = vpop.f32.mrb[0].mxu0
        %v1703 = vadd.f32 0.0, %v1702
        %v1704 = vpop.f32.mrb[0].mxu0
        %1705 = vdwg.mxu0
        %v1707 = vsel %vm1207, %v1558, 0
        %1709 = vmatprep.subr.mxu0 0.0
        %1710 = vmatpush1.msra.mxu0 %v1205
        %1711 = vmatprep.subr.mxu0 0.0
        %1712 = vmatpush1.msra.mxu0 0.0
        %1713 = vmatprep.subr.mxu0 0.0
        %1714 = vmatpush1.msra.mxu0 0.0
        %1715 = vmatprep.subr.mxu0 0.0
        %1716 = vmatpush1.msra.mxu0 0.0
        %1717 = vmatprep.subr.mxu0 0.0
        %1718 = vmatpush1.msra.mxu0 0.0
        %1719 = vmatprep.subr.mxu0 0.0
        %1720 = vmatpush1.msra.mxu0 0.0
        %1721 = vmatprep.subr.mxu0 0.0
        %1722 = vmatpush1.msra.mxu0 0.0
        %1723 = vmatprep.subr.mxu0 0.0
        %1724 = vmatpush1.msra.mxu0 0.0
        %1725 = vmatprep.subr.mxu0 0.0
        %1726 = vmatpush1.msra.mxu0 0.0
        %1727 = vmatprep.subr.mxu0 0.0
        %1728 = vmatpush1.msra.mxu0 0.0
        %1729 = vmatprep.subr.mxu0 0.0
        %1730 = vmatpush1.msra.mxu0 0.0
        %1731 = vmatprep.subr.mxu0 0.0
        %1732 = vmatpush1.msra.mxu0 0.0
        %1733 = vmatprep.subr.mxu0 0.0
        %1734 = vmatpush1.msra.mxu0 0.0
        %1735 = vmatprep.subr.mxu0 0.0
        %1736 = vmatpush1.msra.mxu0 0.0
        %1737 = vmatprep.subr.mxu0 0.0
        %1738 = vmatpush1.msra.mxu0 0.0
        %1739 = vmatprep.subr.mxu0 0.0
        %1740 = vmatpush1.msra.mxu0 0.0
        %1741 = vmatprep.subr.mxu0 0.0
        %1742 = vmatpush1.msra.mxu0 0.0
        %1743 = vmatprep.subr.mxu0 0.0
        %1744 = vmatpush1.msra.mxu0 0.0
        %1745 = vmatprep.subr.mxu0 0.0
        %1746 = vmatpush1.msra.mxu0 0.0
        %1747 = vmatprep.subr.mxu0 0.0
        %1748 = vmatpush1.msra.mxu0 0.0
        %1749 = vmatprep.subr.mxu0 0.0
        %1750 = vmatpush1.msra.mxu0 0.0
        %1751 = vmatprep.subr.mxu0 0.0
        %1752 = vmatpush1.msra.mxu0 0.0
        %1753 = vmatprep.subr.mxu0 0.0
        %1754 = vmatpush1.msra.mxu0 0.0
        %1755 = vmatprep.subr.mxu0 0.0
        %1756 = vmatpush1.msra.mxu0 0.0
        %1757 = vmatprep.subr.mxu0 0.0
        %1758 = vmatpush1.msra.mxu0 0.0
        %1759 = vmatprep.subr.mxu0 0.0
        %1760 = vmatpush1.msra.mxu0 0.0
        %1761 = vmatprep.subr.mxu0 0.0
        %1762 = vmatpush1.msra.mxu0 0.0
        %1763 = vmatprep.subr.mxu0 0.0
        %1764 = vmatpush1.msra.mxu0 0.0
        %1765 = vmatprep.subr.mxu0 0.0
        %1766 = vmatpush1.msra.mxu0 0.0
        %1767 = vmatprep.subr.mxu0 0.0
        %1768 = vmatpush1.msra.mxu0 0.0
        %1769 = vmatprep.subr.mxu0 0.0
        %1770 = vmatpush1.msra.mxu0 0.0
        %1771 = vmatprep.subr.mxu0 0.0
        %1772 = vmatpush1.msra.mxu0 0.0
        %1773 = vmatprep.mubr.f32.mxu0 0.0
        %1774 = vmatmul.mubr.f32.gmra.mrb[0].mxu0 %v1707
        %v1775 = vpop.f32.mrb[0].mxu0
        %v1776 = vadd.f32 0.0, %v1775
        %v1777 = vpop.f32.mrb[0].mxu0
        %1778 = vdwg.mxu0
        %v1780 = vsel %vm1207, %v1559, 0
        %1782 = vmatprep.subr.mxu0 0.0
        %1783 = vmatpush1.msra.mxu0 %v1206
        %1784 = vmatprep.subr.mxu0 0.0
        %1785 = vmatpush1.msra.mxu0 0.0
        %1786 = vmatprep.subr.mxu0 0.0
        %1787 = vmatpush1.msra.mxu0 0.0
        %1788 = vmatprep.subr.mxu0 0.0
        %1789 = vmatpush1.msra.mxu0 0.0
        %1790 = vmatprep.subr.mxu0 0.0
        %1791 = vmatpush1.msra.mxu0 0.0
        %1792 = vmatprep.subr.mxu0 0.0
        %1793 = vmatpush1.msra.mxu0 0.0
        %1794 = vmatprep.subr.mxu0 0.0
        %1795 = vmatpush1.msra.mxu0 0.0
        %1796 = vmatprep.subr.mxu0 0.0
        %1797 = vmatpush1.msra.mxu0 0.0
        %1798 = vmatprep.subr.mxu0 0.0
        %1799 = vmatpush1.msra.mxu0 0.0
        %1800 = vmatprep.subr.mxu0 0.0
        %1801 = vmatpush1.msra.mxu0 0.0
        %1802 = vmatprep.subr.mxu0 0.0
        %1803 = vmatpush1.msra.mxu0 0.0
        %1804 = vmatprep.subr.mxu0 0.0
        %1805 = vmatpush1.msra.mxu0 0.0
        %1806 = vmatprep.subr.mxu0 0.0
        %1807 = vmatpush1.msra.mxu0 0.0
        %1808 = vmatprep.subr.mxu0 0.0
        %1809 = vmatpush1.msra.mxu0 0.0
        %1810 = vmatprep.subr.mxu0 0.0
        %1811 = vmatpush1.msra.mxu0 0.0
        %1812 = vmatprep.subr.mxu0 0.0
        %1813 = vmatpush1.msra.mxu0 0.0
        %1814 = vmatprep.subr.mxu0 0.0
        %1815 = vmatpush1.msra.mxu0 0.0
        %1816 = vmatprep.subr.mxu0 0.0
        %1817 = vmatpush1.msra.mxu0 0.0
        %1818 = vmatprep.subr.mxu0 0.0
        %1819 = vmatpush1.msra.mxu0 0.0
        %1820 = vmatprep.subr.mxu0 0.0
        %1821 = vmatpush1.msra.mxu0 0.0
        %1822 = vmatprep.subr.mxu0 0.0
        %1823 = vmatpush1.msra.mxu0 0.0
        %1824 = vmatprep.subr.mxu0 0.0
        %1825 = vmatpush1.msra.mxu0 0.0
        %1826 = vmatprep.subr.mxu0 0.0
        %1827 = vmatpush1.msra.mxu0 0.0
        %1828 = vmatprep.subr.mxu0 0.0
        %1829 = vmatpush1.msra.mxu0 0.0
        %1830 = vmatprep.subr.mxu0 0.0
        %1831 = vmatpush1.msra.mxu0 0.0
        %1832 = vmatprep.subr.mxu0 0.0
        %1833 = vmatpush1.msra.mxu0 0.0
        %1834 = vmatprep.subr.mxu0 0.0
        %1835 = vmatpush1.msra.mxu0 0.0
        %1836 = vmatprep.subr.mxu0 0.0
        %1837 = vmatpush1.msra.mxu0 0.0
        %1838 = vmatprep.subr.mxu0 0.0
        %1839 = vmatpush1.msra.mxu0 0.0
        %1840 = vmatprep.subr.mxu0 0.0
        %1841 = vmatpush1.msra.mxu0 0.0
        %1842 = vmatprep.subr.mxu0 0.0
        %1843 = vmatpush1.msra.mxu0 0.0
        %1844 = vmatprep.subr.mxu0 0.0
        %1845 = vmatpush1.msra.mxu0 0.0
        %1846 = vmatprep.mubr.f32.mxu0 0.0
        %1847 = vmatmul.mubr.f32.gmra.mrb[0].mxu0 %v1780
        %v1848 = vpop.f32.mrb[0].mxu0
        %v1849 = vadd.f32 0.0, %v1848
        %v1850 = vpop.f32.mrb[0].mxu0
        %1851 = vdwg.mxu0
        %v1852 = vcombine.low %v1630, %v1776
        %v1853 = vcombine.high %v1630, %v1776
        %v1855 = vunpack.c.l.s4 1983009808
        %v1856 = vunpack.c.0.s8 %v1855
        %v1857 = vlaneseq
        %v1858 = vshrl.u32 %v1857, 7
        %v1859 = vsub.s32 %v1856, %v1858
        %v1860 = vrot.slane %v1852, %v1859
        %v1862 = vunpack.c.l.s4 1983009808
        %v1863 = vunpack.c.0.s8 %v1862
        %v1864 = vlaneseq
        %v1865 = vshrl.u32 %v1864, 7
        %v1866 = vsub.s32 %v1863, %v1865
        %v1867 = vrot.slane %v1853, %v1866
        %v1868 = vcombine.low %v1703, %v1849
        %v1869 = vcombine.high %v1703, %v1849
        %v1871 = vunpack.c.l.s4 1983009808
        %v1872 = vunpack.c.0.s8 %v1871
        %v1873 = vlaneseq
        %v1874 = vshrl.u32 %v1873, 7
        %v1875 = vsub.s32 %v1872, %v1874
        %v1876 = vrot.slane %v1868, %v1875
        %v1878 = vunpack.c.l.s4 1983009808
        %v1879 = vunpack.c.0.s8 %v1878
        %v1880 = vlaneseq
        %v1881 = vshrl.u32 %v1880, 7
        %v1882 = vsub.s32 %v1879, %v1881
        %v1883 = vrot.slane %v1869, %v1882
        %v1884 = vcombine.low %v1860, %v1876
        %v1885 = vcombine.high %v1860, %v1876
        %v1887 = vunpack.c.l.s4 1934713408
        %v1888 = vunpack.c.0.s8 %v1887
        %v1889 = vlaneseq
        %v1890 = vshrl.u32 %v1889, 7
        %v1891 = vsub.s32 %v1888, %v1890
        %v1892 = vrot.slane %v1884, %v1891
        %v1894 = vunpack.c.l.s4 1934713408
        %v1895 = vunpack.c.0.s8 %v1894
        %v1896 = vlaneseq
        %v1897 = vshrl.u32 %v1896, 7
        %v1898 = vsub.s32 %v1895, %v1897
        %v1899 = vrot.slane %v1885, %v1898
        %v1900 = vcombine.low %v1867, %v1883
        %v1901 = vcombine.high %v1867, %v1883
        %v1903 = vunpack.c.l.s4 1934713408
        %v1904 = vunpack.c.0.s8 %v1903
        %v1905 = vlaneseq
        %v1906 = vshrl.u32 %v1905, 7
        %v1907 = vsub.s32 %v1904, %v1906
        %v1908 = vrot.slane %v1900, %v1907
        %v1910 = vunpack.c.l.s4 1934713408
        %v1911 = vunpack.c.0.s8 %v1910
        %v1912 = vlaneseq
        %v1913 = vshrl.u32 %v1912, 7
        %v1914 = vsub.s32 %v1911, %v1913
        %v1915 = vrot.slane %v1901, %v1914
        %v1916 = vcombine.high %v1892, 0.0
        %v1917 = vcombine.high %v1899, 0.0
        %v1918 = vcombine.high %v1908, 0.0
        %v1919 = vcombine.high %v1915, 0.0
        %v1920 = vcombine.low %v1892, %v1899
        %v1922 = vunpack.c.l.s4 1983009808
        %v1923 = vunpack.c.0.s8 %v1922
        %v1924 = vlaneseq
        %v1925 = vshrl.u32 %v1924, 7
        %v1926 = vsub.s32 %v1923, %v1925
        %v1927 = vrot.slane %v1920, %v1926
        %v1928 = vcombine.low %v1916, %v1917
        %v1930 = vunpack.c.l.s4 1983009808
        %v1931 = vunpack.c.0.s8 %v1930
        %v1932 = vlaneseq
        %v1933 = vshrl.u32 %v1932, 7
        %v1934 = vsub.s32 %v1931, %v1933
        %v1935 = vrot.slane %v1928, %v1934
        %v1936 = vcombine.low %v1908, %v1915
        %v1938 = vunpack.c.l.s4 1983009808
        %v1939 = vunpack.c.0.s8 %v1938
        %v1940 = vlaneseq
        %v1941 = vshrl.u32 %v1940, 7
        %v1942 = vsub.s32 %v1939, %v1941
        %v1943 = vrot.slane %v1936, %v1942
        %v1944 = vcombine.low %v1918, %v1919
        %v1946 = vunpack.c.l.s4 1983009808
        %v1947 = vunpack.c.0.s8 %v1946
        %v1948 = vlaneseq
        %v1949 = vshrl.u32 %v1948, 7
        %v1950 = vsub.s32 %v1947, %v1949
        %v1951 = vrot.slane %v1944, %v1950
        %v1952 = vcombine.low %v1927, %v1935
        %v1953 = vcombine.high %v1927, %v1935
        %v1955 = vunpack.c.l.s4 1934713408
        %v1956 = vunpack.c.0.s8 %v1955
        %v1957 = vlaneseq
        %v1958 = vshrl.u32 %v1957, 7
        %v1959 = vsub.s32 %v1956, %v1958
        %v1960 = vrot.slane %v1952, %v1959
        %v1962 = vunpack.c.l.s4 1934713408
        %v1963 = vunpack.c.0.s8 %v1962
        %v1964 = vlaneseq
        %v1965 = vshrl.u32 %v1964, 7
        %v1966 = vsub.s32 %v1963, %v1965
        %v1967 = vrot.slane %v1953, %v1966
        %v1968 = vcombine.low %v1943, %v1951
        %v1969 = vcombine.high %v1943, %v1951
        %v1971 = vunpack.c.l.s4 1934713408
        %v1972 = vunpack.c.0.s8 %v1971
        %v1973 = vlaneseq
        %v1974 = vshrl.u32 %v1973, 7
        %v1975 = vsub.s32 %v1972, %v1974
        %v1976 = vrot.slane %v1968, %v1975
        %v1978 = vunpack.c.l.s4 1934713408
        %v1979 = vunpack.c.0.s8 %v1978
        %v1980 = vlaneseq
        %v1981 = vshrl.u32 %v1980, 7
        %v1982 = vsub.s32 %v1979, %v1981
        %v1983 = vrot.slane %v1969, %v1982
        %v1984 = vcombine.low %v1960, %v1976
        %v1985 = vcombine.high %v1960, %v1976
        %v1986 = vcombine.low %v1967, %v1983
        %v1987 = vcombine.high %v1967, %v1983
        %1989 = vrot.lane.b32.xlu0 %v1985, 8
        %v1990 = vpop.permute.xlu0 %1989
        %1993 = vrot.lane.b32.xlu0 %v1986, 16
        %v1994 = vpop.permute.xlu0 %1993
        %1997 = vrot.lane.b32.xlu0 %v1987, 24
        %v1998 = vpop.permute.xlu0 %1997
        %v2000 = vsel %vm1207, %v1984, %v1990
        %vm2001 = vcmask 130048
        %v2002 = vsel %vm2001, %v2000, %v1994
        %vm2003 = vcmask 195584
        %v2004 = vsel %vm2003, %v2002, %v1998
        %v2005 = vld [vmem:[%s8] sm:$0xff]
        %v2006 = vld [vmem:[%s8 + $0x8] sm:$0xff]
        %v2007 = vld [vmem:[%s8 + $0x10] sm:$0xff]
        %v2008 = vld [vmem:[%s8 + $0x18] sm:$0xff]
        %v2009 = vld [vmem:[%s9] sm:$0x1]
        %v2011 = vlaneseq
        %v2012 = vshrl.u32 %v2011, 7
        %v2013 = vsub.s32 0, %v2012
        %v2014 = vrot.slane %v2009, %v2013
        %v2017 = vsel %vm555, %v2004, 0
        %2019 = vmatprep.subr.mxu0 0.0
        %2020 = vmatpush1.msra.mxu0 %v2005
        %2021 = vmatprep.subr.mxu0 0.0
        %2022 = vmatpush1.msra.mxu0 %v2006
        %2023 = vmatprep.subr.mxu0 0.0
        %2024 = vmatpush1.msra.mxu0 %v2007
        %2025 = vmatprep.subr.mxu0 0.0
        %2026 = vmatpush1.msra.mxu0 %v2008
        %2027 = vmatprep.subr.mxu0 0.0
        %2028 = vmatpush1.msra.mxu0 0.0
        %2029 = vmatprep.subr.mxu0 0.0
        %2030 = vmatpush1.msra.mxu0 0.0
        %2031 = vmatprep.subr.mxu0 0.0
        %2032 = vmatpush1.msra.mxu0 0.0
        %2033 = vmatprep.subr.mxu0 0.0
        %2034 = vmatpush1.msra.mxu0 0.0
        %2035 = vmatprep.subr.mxu0 0.0
        %2036 = vmatpush1.msra.mxu0 0.0
        %2037 = vmatprep.subr.mxu0 0.0
        %2038 = vmatpush1.msra.mxu0 0.0
        %2039 = vmatprep.subr.mxu0 0.0
        %2040 = vmatpush1.msra.mxu0 0.0
        %2041 = vmatprep.subr.mxu0 0.0
        %2042 = vmatpush1.msra.mxu0 0.0
        %2043 = vmatprep.subr.mxu0 0.0
        %2044 = vmatpush1.msra.mxu0 0.0
        %2045 = vmatprep.subr.mxu0 0.0
        %2046 = vmatpush1.msra.mxu0 0.0
        %2047 = vmatprep.subr.mxu0 0.0
        %2048 = vmatpush1.msra.mxu0 0.0
        %2049 = vmatprep.subr.mxu0 0.0
        %2050 = vmatpush1.msra.mxu0 0.0
        %2051 = vmatprep.subr.mxu0 0.0
        %2052 = vmatpush1.msra.mxu0 0.0
        %2053 = vmatprep.subr.mxu0 0.0
        %2054 = vmatpush1.msra.mxu0 0.0
        %2055 = vmatprep.subr.mxu0 0.0
        %2056 = vmatpush1.msra.mxu0 0.0
        %2057 = vmatprep.subr.mxu0 0.0
        %2058 = vmatpush1.msra.mxu0 0.0
        %2059 = vmatprep.subr.mxu0 0.0
        %2060 = vmatpush1.msra.mxu0 0.0
        %2061 = vmatprep.subr.mxu0 0.0
        %2062 = vmatpush1.msra.mxu0 0.0
        %2063 = vmatprep.subr.mxu0 0.0
        %2064 = vmatpush1.msra.mxu0 0.0
        %2065 = vmatprep.subr.mxu0 0.0
        %2066 = vmatpush1.msra.mxu0 0.0
        %2067 = vmatprep.subr.mxu0 0.0
        %2068 = vmatpush1.msra.mxu0 0.0
        %2069 = vmatprep.subr.mxu0 0.0
        %2070 = vmatpush1.msra.mxu0 0.0
        %2071 = vmatprep.subr.mxu0 0.0
        %2072 = vmatpush1.msra.mxu0 0.0
        %2073 = vmatprep.subr.mxu0 0.0
        %2074 = vmatpush1.msra.mxu0 0.0
        %2075 = vmatprep.subr.mxu0 0.0
        %2076 = vmatpush1.msra.mxu0 0.0
        %2077 = vmatprep.subr.mxu0 0.0
        %2078 = vmatpush1.msra.mxu0 0.0
        %2079 = vmatprep.subr.mxu0 0.0
        %2080 = vmatpush1.msra.mxu0 0.0
        %2081 = vmatprep.subr.mxu0 0.0
        %2082 = vmatpush1.msra.mxu0 0.0
        %2083 = vmatprep.mubr.f32.mxu0 0.0
        %2084 = vmatmul.mubr.f32.gmra.mrb[0].mxu0 %v2017
        %v2085 = vpop.f32.mrb[0].mxu0
        %v2086 = vadd.f32 %v2014, %v2085
        %v2087 = vpop.f32.mrb[0].mxu0
        %2088 = vdwg.mxu0
        %v2089 = vadd.f32 %v553, %v2086
        %v2090 = vsel %vm555, %v2089, 0.0
        %2091 = vadd.xlane.f32.xlu0 %v2090
        %v2092 = vpop.xlane.xlu0 %2091
        %v2093 = vmul.f32 %v2092, %v559
        %v2094 = vsub.f32 %v2089, %v2093
        %v2095 = vmul.f32 %v2094, %v2094
        %v2096 = vsel %vm555, %v2095, 0.0
        %2097 = vadd.xlane.f32.xlu0 %v2096
        %v2098 = vpop.xlane.xlu0 %2097
        %v2099 = vmul.f32 %v2098, %v559
        %v2100 = vadd.f32 %v2099, 1e-06
        %v2101 = vrsqrt.pop %v2100
        %v2102 = vmul.f32 %v2094, %v2101
        %v2103 = vmul.f32 %v2102, %v574
        %v2104 = vadd.f32 %v2103, %v581
        %v2105 = vld [vmem:[#allocation7] sm:$0xff]
        %v2106 = vld [vmem:[#allocation7 + $0x8] sm:$0xff]
        %v2107 = vld [vmem:[#allocation7 + $0x10] sm:$0xff]
        %v2108 = vld [vmem:[#allocation7 + $0x18] sm:$0xff]
        %v2109 = vld [vmem:[%s11] sm:$0x1]
        %v2111 = vlaneseq
        %v2112 = vshrl.u32 %v2111, 7
        %v2113 = vsub.s32 0, %v2112
        %v2114 = vrot.slane %v2109, %v2113
        %v2117 = vsel %vm555, %v2104, 0
        %2119 = vmatprep.subr.mxu0 0.0
        %2120 = vmatpush1.msra.mxu0 %v2105
        %2121 = vmatprep.subr.mxu0 0.0
        %2122 = vmatpush1.msra.mxu0 %v2106
        %2123 = vmatprep.subr.mxu0 0.0
        %2124 = vmatpush1.msra.mxu0 %v2107
        %2125 = vmatprep.subr.mxu0 0.0
        %2126 = vmatpush1.msra.mxu0 %v2108
        %2127 = vmatprep.subr.mxu0 0.0
        %2128 = vmatpush1.msra.mxu0 0.0
        %2129 = vmatprep.subr.mxu0 0.0
        %2130 = vmatpush1.msra.mxu0 0.0
        %2131 = vmatprep.subr.mxu0 0.0
        %2132 = vmatpush1.msra.mxu0 0.0
        %2133 = vmatprep.subr.mxu0 0.0
        %2134 = vmatpush1.msra.mxu0 0.0
        %2135 = vmatprep.subr.mxu0 0.0
        %2136 = vmatpush1.msra.mxu0 0.0
        %2137 = vmatprep.subr.mxu0 0.0
        %2138 = vmatpush1.msra.mxu0 0.0
        %2139 = vmatprep.subr.mxu0 0.0
        %2140 = vmatpush1.msra.mxu0 0.0
        %2141 = vmatprep.subr.mxu0 0.0
        %2142 = vmatpush1.msra.mxu0 0.0
        %2143 = vmatprep.subr.mxu0 0.0
        %2144 = vmatpush1.msra.mxu0 0.0
        %2145 = vmatprep.subr.mxu0 0.0
        %2146 = vmatpush1.msra.mxu0 0.0
        %2147 = vmatprep.subr.mxu0 0.0
        %2148 = vmatpush1.msra.mxu0 0.0
        %2149 = vmatprep.subr.mxu0 0.0
        %2150 = vmatpush1.msra.mxu0 0.0
        %2151 = vmatprep.subr.mxu0 0.0
        %2152 = vmatpush1.msra.mxu0 0.0
        %2153 = vmatprep.subr.mxu0 0.0
        %2154 = vmatpush1.msra.mxu0 0.0
        %2155 = vmatprep.subr.mxu0 0.0
        %2156 = vmatpush1.msra.mxu0 0.0
        %2157 = vmatprep.subr.mxu0 0.0
        %2158 = vmatpush1.msra.mxu0 0.0
        %2159 = vmatprep.subr.mxu0 0.0
        %2160 = vmatpush1.msra.mxu0 0.0
        %2161 = vmatprep.subr.mxu0 0.0
        %2162 = vmatpush1.msra.mxu0 0.0
        %2163 = vmatprep.subr.mxu0 0.0
        %2164 = vmatpush1.msra.mxu0 0.0
        %2165 = vmatprep.subr.mxu0 0.0
        %2166 = vmatpush1.msra.mxu0 0.0
        %2167 = vmatprep.subr.mxu0 0.0
        %2168 = vmatpush1.msra.mxu0 0.0
        %2169 = vmatprep.subr.mxu0 0.0
        %2170 = vmatpush1.msra.mxu0 0.0
        %2171 = vmatprep.subr.mxu0 0.0
        %2172 = vmatpush1.msra.mxu0 0.0
        %2173 = vmatprep.subr.mxu0 0.0
        %2174 = vmatpush1.msra.mxu0 0.0
        %2175 = vmatprep.subr.mxu0 0.0
        %2176 = vmatpush1.msra.mxu0 0.0
        %2177 = vmatprep.subr.mxu0 0.0
        %2178 = vmatpush1.msra.mxu0 0.0
        %2179 = vmatprep.subr.mxu0 0.0
        %2180 = vmatpush1.msra.mxu0 0.0
        %2181 = vmatprep.subr.mxu0 0.0
        %2182 = vmatpush1.msra.mxu0 0.0
        %2183 = vmatprep.mubr.f32.mxu0 0.0
        %2184 = vmatmul.mubr.f32.gmra.mrb[0].mxu0 %v2117
        %v2185 = vpop.f32.mrb[0].mxu0
        %v2186 = vadd.f32 %v2114, %v2185
        %v2187 = vpop.f32.mrb[0].mxu0
        %2188 = vdwg.mxu0
        %v2189 = vmax.f32 %v2186, 0.0
        %v2190 = vld [vmem:[%s12] sm:$0xff]
        %v2191 = vld [vmem:[%s12 + $0x8] sm:$0xff]
        %v2192 = vld [vmem:[%s12 + $0x10] sm:$0xff]
        %v2193 = vld [vmem:[%s12 + $0x18] sm:$0xff]
        %v2194 = vld [vmem:[%s12 + $0x20] sm:$0xff]
        %v2195 = vld [vmem:[%s12 + $0x28] sm:$0xff]
        %v2196 = vld [vmem:[%s12 + $0x30] sm:$0xff]
        %v2197 = vld [vmem:[%s12 + $0x38] sm:$0xff]
        %v2198 = vld [vmem:[%s13] sm:$0x1]
        %v2200 = vlaneseq
        %v2201 = vshrl.u32 %v2200, 7
        %v2202 = vsub.s32 0, %v2201
        %v2203 = vrot.slane %v2198, %v2202
        %vm2205 = vcmask 523264
        %v2207 = vsel %vm2205, %v2189, 0
        %2209 = vmatprep.subr.mxu0 0.0
        %2210 = vmatpush1.msra.mxu0 %v2190
        %2211 = vmatprep.subr.mxu0 0.0
        %2212 = vmatpush1.msra.mxu0 %v2191
        %2213 = vmatprep.subr.mxu0 0.0
        %2214 = vmatpush1.msra.mxu0 %v2192
        %2215 = vmatprep.subr.mxu0 0.0
        %2216 = vmatpush1.msra.mxu0 %v2193
        %2217 = vmatprep.subr.mxu0 0.0
        %2218 = vmatpush1.msra.mxu0 %v2194
        %2219 = vmatprep.subr.mxu0 0.0
        %2220 = vmatpush1.msra.mxu0 %v2195
        %2221 = vmatprep.subr.mxu0 0.0
        %2222 = vmatpush1.msra.mxu0 %v2196
        %2223 = vmatprep.subr.mxu0 0.0
        %2224 = vmatpush1.msra.mxu0 %v2197
        %2225 = vmatprep.subr.mxu0 0.0
        %2226 = vmatpush1.msra.mxu0 0.0
        %2227 = vmatprep.subr.mxu0 0.0
        %2228 = vmatpush1.msra.mxu0 0.0
        %2229 = vmatprep.subr.mxu0 0.0
        %2230 = vmatpush1.msra.mxu0 0.0
        %2231 = vmatprep.subr.mxu0 0.0
        %2232 = vmatpush1.msra.mxu0 0.0
        %2233 = vmatprep.subr.mxu0 0.0
        %2234 = vmatpush1.msra.mxu0 0.0
        %2235 = vmatprep.subr.mxu0 0.0
        %2236 = vmatpush1.msra.mxu0 0.0
        %2237 = vmatprep.subr.mxu0 0.0
        %2238 = vmatpush1.msra.mxu0 0.0
        %2239 = vmatprep.subr.mxu0 0.0
        %2240 = vmatpush1.msra.mxu0 0.0
        %2241 = vmatprep.subr.mxu0 0.0
        %2242 = vmatpush1.msra.mxu0 0.0
        %2243 = vmatprep.subr.mxu0 0.0
        %2244 = vmatpush1.msra.mxu0 0.0
        %2245 = vmatprep.subr.mxu0 0.0
        %2246 = vmatpush1.msra.mxu0 0.0
        %2247 = vmatprep.subr.mxu0 0.0
        %2248 = vmatpush1.msra.mxu0 0.0
        %2249 = vmatprep.subr.mxu0 0.0
        %2250 = vmatpush1.msra.mxu0 0.0
        %2251 = vmatprep.subr.mxu0 0.0
        %2252 = vmatpush1.msra.mxu0 0.0
        %2253 = vmatprep.subr.mxu0 0.0
        %2254 = vmatpush1.msra.mxu0 0.0
        %2255 = vmatprep.subr.mxu0 0.0
        %2256 = vmatpush1.msra.mxu0 0.0
        %2257 = vmatprep.subr.mxu0 0.0
        %2258 = vmatpush1.msra.mxu0 0.0
        %2259 = vmatprep.subr.mxu0 0.0
        %2260 = vmatpush1.msra.mxu0 0.0
        %2261 = vmatprep.subr.mxu0 0.0
        %2262 = vmatpush1.msra.mxu0 0.0
        %2263 = vmatprep.subr.mxu0 0.0
        %2264 = vmatpush1.msra.mxu0 0.0
        %2265 = vmatprep.subr.mxu0 0.0
        %2266 = vmatpush1.msra.mxu0 0.0
        %2267 = vmatprep.subr.mxu0 0.0
        %2268 = vmatpush1.msra.mxu0 0.0
        %2269 = vmatprep.subr.mxu0 0.0
        %2270 = vmatpush1.msra.mxu0 0.0
        %2271 = vmatprep.subr.mxu0 0.0
        %2272 = vmatpush1.msra.mxu0 0.0
        %2273 = vmatprep.mubr.f32.mxu0 0.0
        %2274 = vmatmul.mubr.f32.gmra.mrb[0].mxu0 %v2207
        %v2275 = vpop.f32.mrb[0].mxu0
        %v2276 = vadd.f32 %v2203, %v2275
        %v2277 = vpop.f32.mrb[0].mxu0
        %2278 = vdwg.mxu0
        %v2279 = vadd.f32 %v2089, %v2276
        %2280 = vst.msk [vmem:[%s550] sm:$0xff] %vm555, %v2279
        %s2281 = sand.u32 %s362, 1
        %s2282 = scalar_lea.sflag [#allocation4], %s2281
        %s2283 = sand.u32 %s362, 1
        %s2284 = smul.addr %s2283, 8
        %s2285 = scalar_lea.vmem [#allocation8], %s2284
        // Predicated region
        $region89: #{tpu_custom_call.1} parent=75 // pred_check
          %p2286 = pneg %p372
        $region90: #{tpu_custom_call.1} parent=75 // pred_check_branch
          %2288 = sbr.rel (%p2286) target = $region92
        $region91: #{tpu_custom_call.1} parent=75 // pred_region
          %s2290 = ssub.s32 128, 128
          %2291 = vsyncadd %s2282, %s2290
          %s2292 = sadd.s32 %s39, %s38
          %s2293 = smul.addr %s2292, 128
          %s2294 = scalar_lea.hbm %s14, %s2293
          %s2296 = sshll.u32 %s2285, 4
          %s2297 = int_to_ptr.vmem [resolvable:$true] %s2296
          %2299 = dma.vmem_to_hbm [thread:$0]  %s2297, 128, %s2294, %s2282
        $region92: #{tpu_custom_call.1} parent=75 // pred_fallthru
          _
      $region76: #{tpu_custom_call.1} parent=5 // pred_fallthru
        _
      %p2300 = scmp.le.s32.totalorder 2, %s29
      // Predicated region
      $region93: #{tpu_custom_call.1} parent=5 // pred_check
        %p2301 = pneg %p2300
      $region94: #{tpu_custom_call.1} parent=5 // pred_check_branch
        %2303 = sbr.rel (%p2301) target = $region96
      $region95: #{tpu_custom_call.1} parent=5 // pred_region
        %s2304 = ssub.s32 %s29, 2
        // Predicated region
        $region97: #{tpu_custom_call.1} parent=95 // pred_check
          %p2305 = pneg %p378
        $region98: #{tpu_custom_call.1} parent=95 // pred_check_branch
          %2307 = sbr.rel (%p2305) target = $region100
        $region99: #{tpu_custom_call.1} parent=95 // pred_region
          %s2308 = sand.u32 %s363, 1
          %s2309 = scalar_lea.sflag [#allocation4], %s2308
          %s2310 = sand.u32 %s363, 1
          %s2311 = smul.addr %s2310, 8
          %s2312 = scalar_lea.vmem [#allocation8], %s2311
          %2313 = dma.done %s2309, 128
        $region100: #{tpu_custom_call.1} parent=95 // pred_fallthru
          _
      $region96: #{tpu_custom_call.1} parent=5 // pred_fallthru
        _
    $region6: #{tpu_custom_call.1} parent=1 // loop_footer
      %s33 = sadd.s32 1, %s29
    $region7: #{tpu_custom_call.1} parent=1 // loop_footer_branch
      %28 = sbr.rel target = $region3
    $region8: #{tpu_custom_call.1} parent=1 // loop_exit
      _
    %2314 = vsyncpa [#allocation3], 1
    %s2315 = scalar_lea.sflag [#allocation3], 1
    %2316 = vsyncpa %s2315, 1
    %2317 = vsyncpa [#allocation6], 1
    %s2318 = scalar_lea.sflag [#allocation6], 1
    %2319 = vsyncpa %s2318, 1
    %2320 = vsyncpa [#allocation4], 1
    %s2321 = scalar_lea.sflag [#allocation4], 1
    %2322 = vsyncpa %s2321, 1

</llo_original>
